<compile_context>
chip_gen: v5e
topology: v5e:2x2
jax: 0.10.0
libtpu: 0.0.40
codegen_flags: <defaults>
</compile_context>

<pallas_src>
import functools

import jax
import jax.numpy as jnp
import numpy as np
from jax.experimental import pallas as pl
from jax.experimental.pallas import tpu as pltpu

BN_EPS = 1e-5
VMEM_LIMIT_BYTES = 32 * 1024 * 1024   # safe on v5e/v6e (128 MiB) and v7x (64 MiB/TC)


# ----------------------------------------------------------------------------
# Kernels
# ----------------------------------------------------------------------------
def _conv_tile(xp, w_ref, W, Ls):
    """9 accumulating MXU matmuls on lane-shifted slices -> (Cout, Ls) f32.

    xp    : (Cin, Lin) bf16 value, Lin = (H+2)*(W+2)  (padded rows, flattened)
    w_ref : (9, Cout, Cin) bf16 ref (folded 3x3 weights, tap-major)
    """
    acc = None
    for kh in range(3):                                 # static unroll: 9 taps
        for kw in range(3):
            off = kh * (W + 2) + kw
            part = jnp.dot(w_ref[kh * 3 + kw], xp[:, off:off + Ls],
                           preferred_element_type=jnp.float32)
            acc = part if acc is None else acc + part
    return acc


def conv_stats_kernel(x_ref, w_ref, center_ref, mask_ref, stat_ref, *, H, W):
    """Pass 1: per-image partial BN statistics (centered sum, sum of squares)."""
    Ls = H * (W + 2) - 2
    acc = _conv_tile(x_ref[0], w_ref, W, Ls)            # (Cout, Ls) f32
    c = (acc - center_ref[...]) * mask_ref[...]         # zero the junk pad cols
    stat_ref[0, :, 0:1] = jnp.sum(c, axis=1, keepdims=True)
    stat_ref[0, :, 1:2] = jnp.sum(c * c, axis=1, keepdims=True)


def conv_bn_relu_kernel(x_ref, w_ref, scale_ref, shift_ref, o_ref, *, H, W):
    """Pass 2: conv + fused per-channel scale/shift + ReLU, NCHW-flat store."""
    Ls = H * (W + 2) - 2
    acc = _conv_tile(x_ref[0], w_ref, W, Ls)            # (Cout, Ls) f32
    y = jnp.maximum(acc * scale_ref[...] + shift_ref[...], 0.0)
    # Strip the 2 junk (W-padding) columns of every row inside VMEM; the HBM
    # store of the (Cout, H*W) block itself stays unmasked / lane-dense.
    for r in range(H):
        o_ref[0, :, r * W:(r + 1) * W] = y[:, r * (W + 2):r * (W + 2) + W]


# ----------------------------------------------------------------------------
# Wrapper
# ----------------------------------------------------------------------------
@jax.jit
def conv_forward(x_nchw, params):
    (w_sq, b_sq, w_v, b_v, w_h, b_h, gamma, beta) = params
    N, Cin, H, W = x_nchw.shape
    Cout = w_sq.shape[0]

    # ---- fold the three convs into one 3x3 kernel (exact identity) --------
    w = w_sq                                            # (Cout, Cin, 3, 3) OIHW
    w = w.at[:, :, 1, :].add(w_v[:, :, 0, :])           # 1x3 -> middle row
    w = w.at[:, :, :, 1].add(w_h[:, :, :, 0])           # 3x1 -> middle column
    # Conv biases dropped: they cancel exactly under train-mode BatchNorm.
    w9 = jnp.transpose(w, (2, 3, 0, 1)).reshape(9, Cout, Cin).astype(jnp.bfloat16)

    # ---- pad once; the row-flatten is a free (contiguous) reshape ----------
    Lin = (H + 2) * (W + 2)
    Ls = H * (W + 2) - 2
    HW = H * W
    xpad = jnp.pad(x_nchw.astype(jnp.bfloat16),
                   ((0, 0), (0, 0), (1, 1), (1, 1)))    # (N, Cin, H+2, W+2)
    xflat = xpad.reshape(N, Cin, Lin)                   # metadata-only reshape
    # TODO(synk): for images whose per-image block exceeds the VMEM budget, add
    # H-tiling with halo fetch (memory_space=pl.ANY + pltpu.make_async_copy).

    # Valid-column mask (row-flattening interleaves the 2 W-padding columns).
    col = jnp.arange(Ls, dtype=jnp.int32) % (W + 2)
    mask = (col < W).astype(jnp.float32).reshape(1, Ls)

    # Provisional per-channel conv-output mean (numerical centering for the
    # variance; the formula below is exact for any value, a close one avoids
    # catastrophic cancellation in sum-of-squares).
    x_mean_c = jnp.mean(x_nchw.astype(jnp.float32), axis=(0, 2, 3))      # (Cin,)
    center = jnp.einsum('oihw,i->o', w.astype(jnp.float32), x_mean_c)    # (Cout,)

    grid = (N,)   # one whole image per step; even split over v7x's 2 cores
    x_spec = pl.BlockSpec((1, Cin, Lin), lambda n: (n, 0, 0))
    w_spec = pl.BlockSpec((9, Cout, Cin), lambda n: (0, 0, 0))
    ch_spec = pl.BlockSpec((Cout, 1), lambda n: (0, 0))
    cparams = pltpu.CompilerParams(
        dimension_semantics=("parallel",),
        vmem_limit_bytes=VMEM_LIMIT_BYTES,
    )

    # ---- pass 1: conv + per-image partial BN statistics --------------------
    stats = pl.pallas_call(
        functools.partial(conv_stats_kernel, H=H, W=W),
        out_shape=jax.ShapeDtypeStruct((N, Cout, 2), jnp.float32),
        grid=grid,
        in_specs=[x_spec, w_spec, ch_spec,
                  pl.BlockSpec((1, Ls), lambda n: (0, 0))],
        out_specs=pl.BlockSpec((1, Cout, 2), lambda n: (n, 0, 0)),
        compiler_params=cparams,
    )(xflat, w9, center.reshape(Cout, 1), mask)

    # Tiny per-channel reduction + gamma/beta fold (plain JAX, negligible).
    cnt = float(N * H * W)
    d = jnp.sum(stats[:, :, 0], axis=0) / cnt
    var = jnp.maximum(jnp.sum(stats[:, :, 1], axis=0) / cnt - d * d, 0.0)
    mean = center + d
    scale = (gamma * jax.lax.rsqrt(var + BN_EPS)).astype(jnp.float32)
    shift = (beta - mean * scale).astype(jnp.float32)

    # ---- pass 2: conv + fused scale/shift + ReLU, direct NCHW-flat output --
    out = pl.pallas_call(
        functools.partial(conv_bn_relu_kernel, H=H, W=W),
        out_shape=jax.ShapeDtypeStruct((N, Cout, HW), jnp.float32),
        grid=grid,
        in_specs=[x_spec, w_spec, ch_spec, ch_spec],
        out_specs=pl.BlockSpec((1, Cout, HW), lambda n: (n, 0, 0)),
        compiler_params=cparams,
    )(xflat, w9, scale.reshape(Cout, 1), shift.reshape(Cout, 1))

    return out.reshape(N, Cout, H, W)    # free (contiguous) reshape, no copy


# ----------------------------------------------------------------------------
# Pure-JAX reference matching the PyTorch module (fresh module, train mode)
# ----------------------------------------------------------------------------
def reference(x_nchw, params):
    (w_sq, b_sq, w_v, b_v, w_h, b_h, gamma, beta) = params

    def conv(x, w, b, pad):
        y = jax.lax.conv_general_dilated(
            x, w, window_strides=(1, 1), padding=pad,
            dimension_numbers=("NCHW", "OIHW", "NCHW"))
        return y + b[None, :, None, None]

    x1 = conv(x_nchw, w_sq, b_sq, ((1, 1), (1, 1)))
    x2 = conv(x_nchw, w_v, b_v, ((0, 0), (1, 1)))
    x3 = conv(x_nchw, w_h, b_h, ((1, 1), (0, 0)))
    s = x1 + x2 + x3
    mean = jnp.mean(s, axis=(0, 2, 3), keepdims=True)
    var = jnp.mean((s - mean) ** 2, axis=(0, 2, 3), keepdims=True)
    y = ((s - mean) * jax.lax.rsqrt(var + BN_EPS)
         * gamma[None, :, None, None] + beta[None, :, None, None])
    return jnp.maximum(y, 0.0)


if __name__ == "__main__":
    key = jax.random.PRNGKey(0)
    ks = jax.random.split(key, 7)
    N, Cin, Cout, H, W = 2, 4, 8, 16, 16

    w_sq = jax.random.normal(ks[0], (Cout, Cin, 3, 3), jnp.float32) * 0.1
    b_sq = jax.random.normal(ks[1], (Cout,), jnp.float32) * 0.1
    w_v = jax.random.normal(ks[2], (Cout, Cin, 1, 3), jnp.float32) * 0.1
    b_v = jax.random.normal(ks[3], (Cout,), jnp.float32) * 0.1
    w_h = jax.random.normal(ks[4], (Cout, Cin, 3, 1), jnp.float32) * 0.1
    b_h = jax.random.normal(ks[5], (Cout,), jnp.float32) * 0.1
    gamma = jnp.ones((Cout,), jnp.float32)   # PyTorch BatchNorm2d default init
    beta = jnp.zeros((Cout,), jnp.float32)
    params = (w_sq, b_sq, w_v, b_v, w_h, b_h, gamma, beta)

    x = jax.random.normal(ks[6], (N, Cin, H, W), jnp.float32)

    out = jax.block_until_ready(conv_forward(x, params))
    ref = jax.block_until_ready(reference(x, params))

    # bf16 activations/weights on the MXU (f32 reference) -> bf16-level tolerance.
    if not np.allclose(np.asarray(out), np.asarray(ref), rtol=2e-2, atol=2e-2):
        err = float(np.max(np.abs(np.asarray(out) - np.asarray(ref))))
        raise AssertionError(f"Pallas kernel does not match reference (max err {err})")

    print("KERNEL_OK")
</pallas_src>

<mosaic_0001>
module attributes {stable_mosaic.version = 11 : i64} {
  func.func @conv_stats_kernel(%arg0: i32, %arg1: memref<1x4x324xbf16, #tpu.memory_space<vmem>>, %arg2: memref<9x8x4xbf16, #tpu.memory_space<vmem>>, %arg3: memref<8x1xf32, #tpu.memory_space<vmem>>, %arg4: memref<1x286xf32, #tpu.memory_space<vmem>>, %arg5: memref<1x8x2xf32, #tpu.memory_space<vmem>>) attributes {dimension_semantics = [#tpu.dimension_semantics<parallel>], iteration_bounds = array<i64: 2>, scalar_prefetch = 0 : i64, scratch_operands = 0 : i64, tpu.core_type = #tpu.core_type<tc>, window_params = [{transform_indices = @transform_0, window_bounds = array<i64: 1, 4, 324>}, {pipeline_mode = #tpu.pipeline_mode<synchronous>, transform_indices = @transform_1, window_bounds = array<i64: 9, 8, 4>}, {pipeline_mode = #tpu.pipeline_mode<synchronous>, transform_indices = @transform_2, window_bounds = array<i64: 8, 1>}, {pipeline_mode = #tpu.pipeline_mode<synchronous>, transform_indices = @transform_3, window_bounds = array<i64: 1, 286>}, {transform_indices = @transform_4, window_bounds = array<i64: 1, 8, 2>}]} {
    %c0 = arith.constant 0 : index
    %c0_0 = arith.constant 0 : index
    %c0_1 = arith.constant 0 : index
    %0 = vector.load %arg1[%c0, %c0_0, %c0_1] : memref<1x4x324xbf16, #tpu.memory_space<vmem>>, vector<1x4x324xbf16>
    %1 = vector.shape_cast %0 : vector<1x4x324xbf16> to vector<4x324xbf16>
    %c0_2 = arith.constant 0 : index
    %c0_3 = arith.constant 0 : index
    %c0_4 = arith.constant 0 : index
    %2 = vector.load %arg2[%c0_2, %c0_3, %c0_4] : memref<9x8x4xbf16, #tpu.memory_space<vmem>>, vector<1x8x4xbf16>
    %3 = vector.shape_cast %2 : vector<1x8x4xbf16> to vector<8x4xbf16>
    %4 = vector.extract_strided_slice %1 {offsets = [0, 0], sizes = [4, 286], strides = [1, 1]} : vector<4x324xbf16> to vector<4x286xbf16>
    %cst = arith.constant dense<0.000000e+00> : vector<8x286xf32>
    %5 = tpu.matmul %3, %4, %cst {dimension_numbers = #tpu.dot_dimension_numbers<[1], [0], [0], [1], [0, 0, 1, 1], [], []>} : vector<8x4xbf16>, vector<4x286xbf16>, vector<8x286xf32> -> vector<8x286xf32>
    %c1 = arith.constant 1 : index
    %c0_5 = arith.constant 0 : index
    %c0_6 = arith.constant 0 : index
    %6 = vector.load %arg2[%c1, %c0_5, %c0_6] : memref<9x8x4xbf16, #tpu.memory_space<vmem>>, vector<1x8x4xbf16>
    %7 = vector.shape_cast %6 : vector<1x8x4xbf16> to vector<8x4xbf16>
    %8 = vector.extract_strided_slice %1 {offsets = [0, 1], sizes = [4, 286], strides = [1, 1]} : vector<4x324xbf16> to vector<4x286xbf16>
    %cst_7 = arith.constant dense<0.000000e+00> : vector<8x286xf32>
    %9 = tpu.matmul %7, %8, %cst_7 {dimension_numbers = #tpu.dot_dimension_numbers<[1], [0], [0], [1], [0, 0, 1, 1], [], []>} : vector<8x4xbf16>, vector<4x286xbf16>, vector<8x286xf32> -> vector<8x286xf32>
    %10 = arith.addf %5, %9 : vector<8x286xf32>
    %c2 = arith.constant 2 : index
    %c0_8 = arith.constant 0 : index
    %c0_9 = arith.constant 0 : index
    %11 = vector.load %arg2[%c2, %c0_8, %c0_9] : memref<9x8x4xbf16, #tpu.memory_space<vmem>>, vector<1x8x4xbf16>
    %12 = vector.shape_cast %11 : vector<1x8x4xbf16> to vector<8x4xbf16>
    %13 = vector.extract_strided_slice %1 {offsets = [0, 2], sizes = [4, 286], strides = [1, 1]} : vector<4x324xbf16> to vector<4x286xbf16>
    %cst_10 = arith.constant dense<0.000000e+00> : vector<8x286xf32>
    %14 = tpu.matmul %12, %13, %cst_10 {dimension_numbers = #tpu.dot_dimension_numbers<[1], [0], [0], [1], [0, 0, 1, 1], [], []>} : vector<8x4xbf16>, vector<4x286xbf16>, vector<8x286xf32> -> vector<8x286xf32>
    %15 = arith.addf %10, %14 : vector<8x286xf32>
    %c3 = arith.constant 3 : index
    %c0_11 = arith.constant 0 : index
    %c0_12 = arith.constant 0 : index
    %16 = vector.load %arg2[%c3, %c0_11, %c0_12] : memref<9x8x4xbf16, #tpu.memory_space<vmem>>, vector<1x8x4xbf16>
    %17 = vector.shape_cast %16 : vector<1x8x4xbf16> to vector<8x4xbf16>
    %18 = vector.extract_strided_slice %1 {offsets = [0, 18], sizes = [4, 286], strides = [1, 1]} : vector<4x324xbf16> to vector<4x286xbf16>
    %cst_13 = arith.constant dense<0.000000e+00> : vector<8x286xf32>
    %19 = tpu.matmul %17, %18, %cst_13 {dimension_numbers = #tpu.dot_dimension_numbers<[1], [0], [0], [1], [0, 0, 1, 1], [], []>} : vector<8x4xbf16>, vector<4x286xbf16>, vector<8x286xf32> -> vector<8x286xf32>
    %20 = arith.addf %15, %19 : vector<8x286xf32>
    %c4 = arith.constant 4 : index
    %c0_14 = arith.constant 0 : index
    %c0_15 = arith.constant 0 : index
    %21 = vector.load %arg2[%c4, %c0_14, %c0_15] : memref<9x8x4xbf16, #tpu.memory_space<vmem>>, vector<1x8x4xbf16>
    %22 = vector.shape_cast %21 : vector<1x8x4xbf16> to vector<8x4xbf16>
    %23 = vector.extract_strided_slice %1 {offsets = [0, 19], sizes = [4, 286], strides = [1, 1]} : vector<4x324xbf16> to vector<4x286xbf16>
    %cst_16 = arith.constant dense<0.000000e+00> : vector<8x286xf32>
    %24 = tpu.matmul %22, %23, %cst_16 {dimension_numbers = #tpu.dot_dimension_numbers<[1], [0], [0], [1], [0, 0, 1, 1], [], []>} : vector<8x4xbf16>, vector<4x286xbf16>, vector<8x286xf32> -> vector<8x286xf32>
    %25 = arith.addf %20, %24 : vector<8x286xf32>
    %c5 = arith.constant 5 : index
    %c0_17 = arith.constant 0 : index
    %c0_18 = arith.constant 0 : index
    %26 = vector.load %arg2[%c5, %c0_17, %c0_18] : memref<9x8x4xbf16, #tpu.memory_space<vmem>>, vector<1x8x4xbf16>
    %27 = vector.shape_cast %26 : vector<1x8x4xbf16> to vector<8x4xbf16>
    %28 = vector.extract_strided_slice %1 {offsets = [0, 20], sizes = [4, 286], strides = [1, 1]} : vector<4x324xbf16> to vector<4x286xbf16>
    %cst_19 = arith.constant dense<0.000000e+00> : vector<8x286xf32>
    %29 = tpu.matmul %27, %28, %cst_19 {dimension_numbers = #tpu.dot_dimension_numbers<[1], [0], [0], [1], [0, 0, 1, 1], [], []>} : vector<8x4xbf16>, vector<4x286xbf16>, vector<8x286xf32> -> vector<8x286xf32>
    %30 = arith.addf %25, %29 : vector<8x286xf32>
    %c6 = arith.constant 6 : index
    %c0_20 = arith.constant 0 : index
    %c0_21 = arith.constant 0 : index
    %31 = vector.load %arg2[%c6, %c0_20, %c0_21] : memref<9x8x4xbf16, #tpu.memory_space<vmem>>, vector<1x8x4xbf16>
    %32 = vector.shape_cast %31 : vector<1x8x4xbf16> to vector<8x4xbf16>
    %33 = vector.extract_strided_slice %1 {offsets = [0, 36], sizes = [4, 286], strides = [1, 1]} : vector<4x324xbf16> to vector<4x286xbf16>
    %cst_22 = arith.constant dense<0.000000e+00> : vector<8x286xf32>
    %34 = tpu.matmul %32, %33, %cst_22 {dimension_numbers = #tpu.dot_dimension_numbers<[1], [0], [0], [1], [0, 0, 1, 1], [], []>} : vector<8x4xbf16>, vector<4x286xbf16>, vector<8x286xf32> -> vector<8x286xf32>
    %35 = arith.addf %30, %34 : vector<8x286xf32>
    %c7 = arith.constant 7 : index
    %c0_23 = arith.constant 0 : index
    %c0_24 = arith.constant 0 : index
    %36 = vector.load %arg2[%c7, %c0_23, %c0_24] : memref<9x8x4xbf16, #tpu.memory_space<vmem>>, vector<1x8x4xbf16>
    %37 = vector.shape_cast %36 : vector<1x8x4xbf16> to vector<8x4xbf16>
    %38 = vector.extract_strided_slice %1 {offsets = [0, 37], sizes = [4, 286], strides = [1, 1]} : vector<4x324xbf16> to vector<4x286xbf16>
    %cst_25 = arith.constant dense<0.000000e+00> : vector<8x286xf32>
    %39 = tpu.matmul %37, %38, %cst_25 {dimension_numbers = #tpu.dot_dimension_numbers<[1], [0], [0], [1], [0, 0, 1, 1], [], []>} : vector<8x4xbf16>, vector<4x286xbf16>, vector<8x286xf32> -> vector<8x286xf32>
    %40 = arith.addf %35, %39 : vector<8x286xf32>
    %c8 = arith.constant 8 : index
    %c0_26 = arith.constant 0 : index
    %c0_27 = arith.constant 0 : index
    %41 = vector.load %arg2[%c8, %c0_26, %c0_27] : memref<9x8x4xbf16, #tpu.memory_space<vmem>>, vector<1x8x4xbf16>
    %42 = vector.shape_cast %41 : vector<1x8x4xbf16> to vector<8x4xbf16>
    %43 = vector.extract_strided_slice %1 {offsets = [0, 38], sizes = [4, 286], strides = [1, 1]} : vector<4x324xbf16> to vector<4x286xbf16>
    %cst_28 = arith.constant dense<0.000000e+00> : vector<8x286xf32>
    %44 = tpu.matmul %42, %43, %cst_28 {dimension_numbers = #tpu.dot_dimension_numbers<[1], [0], [0], [1], [0, 0, 1, 1], [], []>} : vector<8x4xbf16>, vector<4x286xbf16>, vector<8x286xf32> -> vector<8x286xf32>
    %45 = arith.addf %40, %44 : vector<8x286xf32>
    %c0_29 = arith.constant 0 : index
    %c0_30 = arith.constant 0 : index
    %46 = vector.load %arg3[%c0_29, %c0_30] : memref<8x1xf32, #tpu.memory_space<vmem>>, vector<8x1xf32>
    %47 = vector.broadcast %46 : vector<8x1xf32> to vector<8x286xf32>
    %48 = arith.subf %45, %47 : vector<8x286xf32>
    %c0_31 = arith.constant 0 : index
    %c0_32 = arith.constant 0 : index
    %49 = vector.load %arg4[%c0_31, %c0_32] : memref<1x286xf32, #tpu.memory_space<vmem>>, vector<1x286xf32>
    %50 = vector.broadcast %49 : vector<1x286xf32> to vector<8x286xf32>
    %51 = arith.mulf %48, %50 : vector<8x286xf32>
    %cst_33 = arith.constant dense<0.000000e+00> : vector<8xf32>
    %52 = vector.multi_reduction <add>, %51, %cst_33 [1] : vector<8x286xf32> to vector<8xf32>
    %53 = vector.shape_cast %52 : vector<8xf32> to vector<8x1xf32>
    %c0_34 = arith.constant 0 : index
    %c0_35 = arith.constant 0 : index
    %c0_36 = arith.constant 0 : index
    %54 = vector.load %arg5[%c0_34, %c0_35, %c0_36] : memref<1x8x2xf32, #tpu.memory_space<vmem>>, vector<1x8x1xf32>
    %55 = vector.shape_cast %54 : vector<1x8x1xf32> to vector<8x1xf32>
    %56 = vector.shape_cast %53 : vector<8x1xf32> to vector<1x8x1xf32>
    tpu.vector_store %arg5[%c0_34, %c0_35, %c0_36], %56 {strides = array<i32>} : memref<1x8x2xf32, #tpu.memory_space<vmem>>, vector<1x8x1xf32>,
    %57 = arith.mulf %51, %51 : vector<8x286xf32>
    %cst_37 = arith.constant dense<0.000000e+00> : vector<8xf32>
    %58 = vector.multi_reduction <add>, %57, %cst_37 [1] : vector<8x286xf32> to vector<8xf32>
    %59 = vector.shape_cast %58 : vector<8xf32> to vector<8x1xf32>
    %c0_38 = arith.constant 0 : index
    %c0_39 = arith.constant 0 : index
    %c1_40 = arith.constant 1 : index
    %60 = vector.load %arg5[%c0_38, %c0_39, %c1_40] : memref<1x8x2xf32, #tpu.memory_space<vmem>>, vector<1x8x1xf32>
    %61 = vector.shape_cast %60 : vector<1x8x1xf32> to vector<8x1xf32>
    %62 = vector.shape_cast %59 : vector<8x1xf32> to vector<1x8x1xf32>
    tpu.vector_store %arg5[%c0_38, %c0_39, %c1_40], %62 {strides = array<i32>} : memref<1x8x2xf32, #tpu.memory_space<vmem>>, vector<1x8x1xf32>,
    return
  }
  func.func @transform_0(%arg0: i32) -> (i32, i32, i32) {
    %c0_i32 = arith.constant 0 : i32
    %c0_i32_0 = arith.constant 0 : i32
    %c0_i32_1 = arith.constant 0 : i32
    return %arg0, %c0_i32, %c0_i32_0 : i32, i32, i32
  }
  func.func @transform_1(%arg0: i32) -> (i32, i32, i32) {
    %c0_i32 = arith.constant 0 : i32
    %c0_i32_0 = arith.constant 0 : i32
    %c0_i32_1 = arith.constant 0 : i32
    %c0_i32_2 = arith.constant 0 : i32
    return %c0_i32, %c0_i32_0, %c0_i32_1 : i32, i32, i32
  }
  func.func @transform_2(%arg0: i32) -> (i32, i32) {
    %c0_i32 = arith.constant 0 : i32
    %c0_i32_0 = arith.constant 0 : i32
    %c0_i32_1 = arith.constant 0 : i32
    return %c0_i32, %c0_i32_0 : i32, i32
  }
  func.func @transform_3(%arg0: i32) -> (i32, i32) {
    %c0_i32 = arith.constant 0 : i32
    %c0_i32_0 = arith.constant 0 : i32
    %c0_i32_1 = arith.constant 0 : i32
    return %c0_i32, %c0_i32_0 : i32, i32
  }
  func.func @transform_4(%arg0: i32) -> (i32, i32, i32) {
    %c0_i32 = arith.constant 0 : i32
    %c0_i32_0 = arith.constant 0 : i32
    %c0_i32_1 = arith.constant 0 : i32
    return %arg0, %c0_i32, %c0_i32_0 : i32, i32, i32
  }
}

module attributes {stable_mosaic.version = 11 : i64} {
  func.func @conv_bn_relu_kernel(%arg0: i32, %arg1: memref<1x4x324xbf16, #tpu.memory_space<vmem>>, %arg2: memref<9x8x4xbf16, #tpu.memory_space<vmem>>, %arg3: memref<8x1xf32, #tpu.memory_space<vmem>>, %arg4: memref<8x1xf32, #tpu.memory_space<vmem>>, %arg5: memref<1x8x256xf32, #tpu.memory_space<vmem>>) attributes {dimension_semantics = [#tpu.dimension_semantics<parallel>], iteration_bounds = array<i64: 2>, scalar_prefetch = 0 : i64, scratch_operands = 0 : i64, tpu.core_type = #tpu.core_type<tc>, window_params = [{transform_indices = @transform_0, window_bounds = array<i64: 1, 4, 324>}, {pipeline_mode = #tpu.pipeline_mode<synchronous>, transform_indices = @transform_1, window_bounds = array<i64: 9, 8, 4>}, {pipeline_mode = #tpu.pipeline_mode<synchronous>, transform_indices = @transform_2, window_bounds = array<i64: 8, 1>}, {pipeline_mode = #tpu.pipeline_mode<synchronous>, transform_indices = @transform_3, window_bounds = array<i64: 8, 1>}, {transform_indices = @transform_4, window_bounds = array<i64: 1, 8, 256>}]} {
    %c0 = arith.constant 0 : index
    %c0_0 = arith.constant 0 : index
    %c0_1 = arith.constant 0 : index
    %0 = vector.load %arg1[%c0, %c0_0, %c0_1] : memref<1x4x324xbf16, #tpu.memory_space<vmem>>, vector<1x4x324xbf16>
    %1 = vector.shape_cast %0 : vector<1x4x324xbf16> to vector<4x324xbf16>
    %c0_2 = arith.constant 0 : index
    %c0_3 = arith.constant 0 : index
    %c0_4 = arith.constant 0 : index
    %2 = vector.load %arg2[%c0_2, %c0_3, %c0_4] : memref<9x8x4xbf16, #tpu.memory_space<vmem>>, vector<1x8x4xbf16>
    %3 = vector.shape_cast %2 : vector<1x8x4xbf16> to vector<8x4xbf16>
    %4 = vector.extract_strided_slice %1 {offsets = [0, 0], sizes = [4, 286], strides = [1, 1]} : vector<4x324xbf16> to vector<4x286xbf16>
    %cst = arith.constant dense<0.000000e+00> : vector<8x286xf32>
    %5 = tpu.matmul %3, %4, %cst {dimension_numbers = #tpu.dot_dimension_numbers<[1], [0], [0], [1], [0, 0, 1, 1], [], []>} : vector<8x4xbf16>, vector<4x286xbf16>, vector<8x286xf32> -> vector<8x286xf32>
    %c1 = arith.constant 1 : index
    %c0_5 = arith.constant 0 : index
    %c0_6 = arith.constant 0 : index
    %6 = vector.load %arg2[%c1, %c0_5, %c0_6] : memref<9x8x4xbf16, #tpu.memory_space<vmem>>, vector<1x8x4xbf16>
    %7 = vector.shape_cast %6 : vector<1x8x4xbf16> to vector<8x4xbf16>
    %8 = vector.extract_strided_slice %1 {offsets = [0, 1], sizes = [4, 286], strides = [1, 1]} : vector<4x324xbf16> to vector<4x286xbf16>
    %cst_7 = arith.constant dense<0.000000e+00> : vector<8x286xf32>
    %9 = tpu.matmul %7, %8, %cst_7 {dimension_numbers = #tpu.dot_dimension_numbers<[1], [0], [0], [1], [0, 0, 1, 1], [], []>} : vector<8x4xbf16>, vector<4x286xbf16>, vector<8x286xf32> -> vector<8x286xf32>
    %10 = arith.addf %5, %9 : vector<8x286xf32>
    %c2 = arith.constant 2 : index
    %c0_8 = arith.constant 0 : index
    %c0_9 = arith.constant 0 : index
    %11 = vector.load %arg2[%c2, %c0_8, %c0_9] : memref<9x8x4xbf16, #tpu.memory_space<vmem>>, vector<1x8x4xbf16>
    %12 = vector.shape_cast %11 : vector<1x8x4xbf16> to vector<8x4xbf16>
    %13 = vector.extract_strided_slice %1 {offsets = [0, 2], sizes = [4, 286], strides = [1, 1]} : vector<4x324xbf16> to vector<4x286xbf16>
    %cst_10 = arith.constant dense<0.000000e+00> : vector<8x286xf32>
    %14 = tpu.matmul %12, %13, %cst_10 {dimension_numbers = #tpu.dot_dimension_numbers<[1], [0], [0], [1], [0, 0, 1, 1], [], []>} : vector<8x4xbf16>, vector<4x286xbf16>, vector<8x286xf32> -> vector<8x286xf32>
    %15 = arith.addf %10, %14 : vector<8x286xf32>
    %c3 = arith.constant 3 : index
    %c0_11 = arith.constant 0 : index
    %c0_12 = arith.constant 0 : index
    %16 = vector.load %arg2[%c3, %c0_11, %c0_12] : memref<9x8x4xbf16, #tpu.memory_space<vmem>>, vector<1x8x4xbf16>
    %17 = vector.shape_cast %16 : vector<1x8x4xbf16> to vector<8x4xbf16>
    %18 = vector.extract_strided_slice %1 {offsets = [0, 18], sizes = [4, 286], strides = [1, 1]} : vector<4x324xbf16> to vector<4x286xbf16>
    %cst_13 = arith.constant dense<0.000000e+00> : vector<8x286xf32>
    %19 = tpu.matmul %17, %18, %cst_13 {dimension_numbers = #tpu.dot_dimension_numbers<[1], [0], [0], [1], [0, 0, 1, 1], [], []>} : vector<8x4xbf16>, vector<4x286xbf16>, vector<8x286xf32> -> vector<8x286xf32>
    %20 = arith.addf %15, %19 : vector<8x286xf32>
    %c4 = arith.constant 4 : index
    %c0_14 = arith.constant 0 : index
    %c0_15 = arith.constant 0 : index
    %21 = vector.load %arg2[%c4, %c0_14, %c0_15] : memref<9x8x4xbf16, #tpu.memory_space<vmem>>, vector<1x8x4xbf16>
    %22 = vector.shape_cast %21 : vector<1x8x4xbf16> to vector<8x4xbf16>
    %23 = vector.extract_strided_slice %1 {offsets = [0, 19], sizes = [4, 286], strides = [1, 1]} : vector<4x324xbf16> to vector<4x286xbf16>
    %cst_16 = arith.constant dense<0.000000e+00> : vector<8x286xf32>
    %24 = tpu.matmul %22, %23, %cst_16 {dimension_numbers = #tpu.dot_dimension_numbers<[1], [0], [0], [1], [0, 0, 1, 1], [], []>} : vector<8x4xbf16>, vector<4x286xbf16>, vector<8x286xf32> -> vector<8x286xf32>
    %25 = arith.addf %20, %24 : vector<8x286xf32>
    %c5 = arith.constant 5 : index
    %c0_17 = arith.constant 0 : index
    %c0_18 = arith.constant 0 : index
    %26 = vector.load %arg2[%c5, %c0_17, %c0_18] : memref<9x8x4xbf16, #tpu.memory_space<vmem>>, vector<1x8x4xbf16>
    %27 = vector.shape_cast %26 : vector<1x8x4xbf16> to vector<8x4xbf16>
    %28 = vector.extract_strided_slice %1 {offsets = [0, 20], sizes = [4, 286], strides = [1, 1]} : vector<4x324xbf16> to vector<4x286xbf16>
    %cst_19 = arith.constant dense<0.000000e+00> : vector<8x286xf32>
    %29 = tpu.matmul %27, %28, %cst_19 {dimension_numbers = #tpu.dot_dimension_numbers<[1], [0], [0], [1], [0, 0, 1, 1], [], []>} : vector<8x4xbf16>, vector<4x286xbf16>, vector<8x286xf32> -> vector<8x286xf32>
    %30 = arith.addf %25, %29 : vector<8x286xf32>
    %c6 = arith.constant 6 : index
    %c0_20 = arith.constant 0 : index
    %c0_21 = arith.constant 0 : index
    %31 = vector.load %arg2[%c6, %c0_20, %c0_21] : memref<9x8x4xbf16, #tpu.memory_space<vmem>>, vector<1x8x4xbf16>
    %32 = vector.shape_cast %31 : vector<1x8x4xbf16> to vector<8x4xbf16>
    %33 = vector.extract_strided_slice %1 {offsets = [0, 36], sizes = [4, 286], strides = [1, 1]} : vector<4x324xbf16> to vector<4x286xbf16>
    %cst_22 = arith.constant dense<0.000000e+00> : vector<8x286xf32>
    %34 = tpu.matmul %32, %33, %cst_22 {dimension_numbers = #tpu.dot_dimension_numbers<[1], [0], [0], [1], [0, 0, 1, 1], [], []>} : vector<8x4xbf16>, vector<4x286xbf16>, vector<8x286xf32> -> vector<8x286xf32>
    %35 = arith.addf %30, %34 : vector<8x286xf32>
    %c7 = arith.constant 7 : index
    %c0_23 = arith.constant 0 : index
    %c0_24 = arith.constant 0 : index
    %36 = vector.load %arg2[%c7, %c0_23, %c0_24] : memref<9x8x4xbf16, #tpu.memory_space<vmem>>, vector<1x8x4xbf16>
    %37 = vector.shape_cast %36 : vector<1x8x4xbf16> to vector<8x4xbf16>
    %38 = vector.extract_strided_slice %1 {offsets = [0, 37], sizes = [4, 286], strides = [1, 1]} : vector<4x324xbf16> to vector<4x286xbf16>
    %cst_25 = arith.constant dense<0.000000e+00> : vector<8x286xf32>
    %39 = tpu.matmul %37, %38, %cst_25 {dimension_numbers = #tpu.dot_dimension_numbers<[1], [0], [0], [1], [0, 0, 1, 1], [], []>} : vector<8x4xbf16>, vector<4x286xbf16>, vector<8x286xf32> -> vector<8x286xf32>
    %40 = arith.addf %35, %39 : vector<8x286xf32>
    %c8 = arith.constant 8 : index
    %c0_26 = arith.constant 0 : index
    %c0_27 = arith.constant 0 : index
    %41 = vector.load %arg2[%c8, %c0_26, %c0_27] : memref<9x8x4xbf16, #tpu.memory_space<vmem>>, vector<1x8x4xbf16>
    %42 = vector.shape_cast %41 : vector<1x8x4xbf16> to vector<8x4xbf16>
    %43 = vector.extract_strided_slice %1 {offsets = [0, 38], sizes = [4, 286], strides = [1, 1]} : vector<4x324xbf16> to vector<4x286xbf16>
    %cst_28 = arith.constant dense<0.000000e+00> : vector<8x286xf32>
    %44 = tpu.matmul %42, %43, %cst_28 {dimension_numbers = #tpu.dot_dimension_numbers<[1], [0], [0], [1], [0, 0, 1, 1], [], []>} : vector<8x4xbf16>, vector<4x286xbf16>, vector<8x286xf32> -> vector<8x286xf32>
    %45 = arith.addf %40, %44 : vector<8x286xf32>
    %c0_29 = arith.constant 0 : index
    %c0_30 = arith.constant 0 : index
    %46 = vector.load %arg3[%c0_29, %c0_30] : memref<8x1xf32, #tpu.memory_space<vmem>>, vector<8x1xf32>
    %47 = vector.broadcast %46 : vector<8x1xf32> to vector<8x286xf32>
    %48 = arith.mulf %45, %47 : vector<8x286xf32>
    %c0_31 = arith.constant 0 : index
    %c0_32 = arith.constant 0 : index
    %49 = vector.load %arg4[%c0_31, %c0_32] : memref<8x1xf32, #tpu.memory_space<vmem>>, vector<8x1xf32>
    %50 = vector.broadcast %49 : vector<8x1xf32> to vector<8x286xf32>
    %51 = arith.addf %48, %50 : vector<8x286xf32>
    %cst_33 = arith.constant 0.000000e+00 : f32
    %52 = vector.broadcast %cst_33 : f32 to vector<8x286xf32>
    %53 = arith.maximumf %51, %52 : vector<8x286xf32>
    %54 = vector.extract_strided_slice %53 {offsets = [0, 0], sizes = [8, 16], strides = [1, 1]} : vector<8x286xf32> to vector<8x16xf32>
    %c0_34 = arith.constant 0 : index
    %c0_35 = arith.constant 0 : index
    %c0_36 = arith.constant 0 : index
    %55 = vector.load %arg5[%c0_34, %c0_35, %c0_36] : memref<1x8x256xf32, #tpu.memory_space<vmem>>, vector<1x8x16xf32>
    %56 = vector.shape_cast %55 : vector<1x8x16xf32> to vector<8x16xf32>
    %57 = vector.shape_cast %54 : vector<8x16xf32> to vector<1x8x16xf32>
    tpu.vector_store %arg5[%c0_34, %c0_35, %c0_36], %57 {strides = array<i32>} : memref<1x8x256xf32, #tpu.memory_space<vmem>>, vector<1x8x16xf32>,
    %58 = vector.extract_strided_slice %53 {offsets = [0, 18], sizes = [8, 16], strides = [1, 1]} : vector<8x286xf32> to vector<8x16xf32>
    %c0_37 = arith.constant 0 : index
    %c0_38 = arith.constant 0 : index
    %c16 = arith.constant 16 : index
    %59 = vector.load %arg5[%c0_37, %c0_38, %c16] : memref<1x8x256xf32, #tpu.memory_space<vmem>>, vector<1x8x16xf32>
    %60 = vector.shape_cast %59 : vector<1x8x16xf32> to vector<8x16xf32>
    %61 = vector.shape_cast %58 : vector<8x16xf32> to vector<1x8x16xf32>
    tpu.vector_store %arg5[%c0_37, %c0_38, %c16], %61 {strides = array<i32>} : memref<1x8x256xf32, #tpu.memory_space<vmem>>, vector<1x8x16xf32>,
    %62 = vector.extract_strided_slice %53 {offsets = [0, 36], sizes = [8, 16], strides = [1, 1]} : vector<8x286xf32> to vector<8x16xf32>
    %c0_39 = arith.constant 0 : index
    %c0_40 = arith.constant 0 : index
    %c32 = arith.constant 32 : index
    %63 = vector.load %arg5[%c0_39, %c0_40, %c32] : memref<1x8x256xf32, #tpu.memory_space<vmem>>, vector<1x8x16xf32>
    %64 = vector.shape_cast %63 : vector<1x8x16xf32> to vector<8x16xf32>
    %65 = vector.shape_cast %62 : vector<8x16xf32> to vector<1x8x16xf32>
    tpu.vector_store %arg5[%c0_39, %c0_40, %c32], %65 {strides = array<i32>} : memref<1x8x256xf32, #tpu.memory_space<vmem>>, vector<1x8x16xf32>,
    %66 = vector.extract_strided_slice %53 {offsets = [0, 54], sizes = [8, 16], strides = [1, 1]} : vector<8x286xf32> to vector<8x16xf32>
    %c0_41 = arith.constant 0 : index
    %c0_42 = arith.constant 0 : index
    %c48 = arith.constant 48 : index
    %67 = vector.load %arg5[%c0_41, %c0_42, %c48] : memref<1x8x256xf32, #tpu.memory_space<vmem>>, vector<1x8x16xf32>
    %68 = vector.shape_cast %67 : vector<1x8x16xf32> to vector<8x16xf32>
    %69 = vector.shape_cast %66 : vector<8x16xf32> to vector<1x8x16xf32>
    tpu.vector_store %arg5[%c0_41, %c0_42, %c48], %69 {strides = array<i32>} : memref<1x8x256xf32, #tpu.memory_space<vmem>>, vector<1x8x16xf32>,
    %70 = vector.extract_strided_slice %53 {offsets = [0, 72], sizes = [8, 16], strides = [1, 1]} : vector<8x286xf32> to vector<8x16xf32>
    %c0_43 = arith.constant 0 : index
    %c0_44 = arith.constant 0 : index
    %c64 = arith.constant 64 : index
    %71 = vector.load %arg5[%c0_43, %c0_44, %c64] : memref<1x8x256xf32, #tpu.memory_space<vmem>>, vector<1x8x16xf32>
    %72 = vector.shape_cast %71 : vector<1x8x16xf32> to vector<8x16xf32>
    %73 = vector.shape_cast %70 : vector<8x16xf32> to vector<1x8x16xf32>
    tpu.vector_store %arg5[%c0_43, %c0_44, %c64], %73 {strides = array<i32>} : memref<1x8x256xf32, #tpu.memory_space<vmem>>, vector<1x8x16xf32>,
    %74 = vector.extract_strided_slice %53 {offsets = [0, 90], sizes = [8, 16], strides = [1, 1]} : vector<8x286xf32> to vector<8x16xf32>
    %c0_45 = arith.constant 0 : index
    %c0_46 = arith.constant 0 : index
    %c80 = arith.constant 80 : index
    %75 = vector.load %arg5[%c0_45, %c0_46, %c80] : memref<1x8x256xf32, #tpu.memory_space<vmem>>, vector<1x8x16xf32>
    %76 = vector.shape_cast %75 : vector<1x8x16xf32> to vector<8x16xf32>
    %77 = vector.shape_cast %74 : vector<8x16xf32> to vector<1x8x16xf32>
    tpu.vector_store %arg5[%c0_45, %c0_46, %c80], %77 {strides = array<i32>} : memref<1x8x256xf32, #tpu.memory_space<vmem>>, vector<1x8x16xf32>,
    %78 = vector.extract_strided_slice %53 {offsets = [0, 108], sizes = [8, 16], strides = [1, 1]} : vector<8x286xf32> to vector<8x16xf32>
    %c0_47 = arith.constant 0 : index
    %c0_48 = arith.constant 0 : index
    %c96 = arith.constant 96 : index
    %79 = vector.load %arg5[%c0_47, %c0_48, %c96] : memref<1x8x256xf32, #tpu.memory_space<vmem>>, vector<1x8x16xf32>
    %80 = vector.shape_cast %79 : vector<1x8x16xf32> to vector<8x16xf32>
    %81 = vector.shape_cast %78 : vector<8x16xf32> to vector<1x8x16xf32>
    tpu.vector_store %arg5[%c0_47, %c0_48, %c96], %81 {strides = array<i32>} : memref<1x8x256xf32, #tpu.memory_space<vmem>>, vector<1x8x16xf32>,
    %82 = vector.extract_strided_slice %53 {offsets = [0, 126], sizes = [8, 16], strides = [1, 1]} : vector<8x286xf32> to vector<8x16xf32>
    %c0_49 = arith.constant 0 : index
    %c0_50 = arith.constant 0 : index
    %c112 = arith.constant 112 : index
    %83 = vector.load %arg5[%c0_49, %c0_50, %c112] : memref<1x8x256xf32, #tpu.memory_space<vmem>>, vector<1x8x16xf32>
    %84 = vector.shape_cast %83 : vector<1x8x16xf32> to vector<8x16xf32>
    %85 = vector.shape_cast %82 : vector<8x16xf32> to vector<1x8x16xf32>
    tpu.vector_store %arg5[%c0_49, %c0_50, %c112], %85 {strides = array<i32>} : memref<1x8x256xf32, #tpu.memory_space<vmem>>, vector<1x8x16xf32>,
    %86 = vector.extract_strided_slice %53 {offsets = [0, 144], sizes = [8, 16], strides = [1, 1]} : vector<8x286xf32> to vector<8x16xf32>
    %c0_51 = arith.constant 0 : index
    %c0_52 = arith.constant 0 : index
    %c128 = arith.constant 128 : index
    %87 = vector.load %arg5[%c0_51, %c0_52, %c128] : memref<1x8x256xf32, #tpu.memory_space<vmem>>, vector<1x8x16xf32>
    %88 = vector.shape_cast %87 : vector<1x8x16xf32> to vector<8x16xf32>
    %89 = vector.shape_cast %86 : vector<8x16xf32> to vector<1x8x16xf32>
    tpu.vector_store %arg5[%c0_51, %c0_52, %c128], %89 {strides = array<i32>} : memref<1x8x256xf32, #tpu.memory_space<vmem>>, vector<1x8x16xf32>,
    %90 = vector.extract_strided_slice %53 {offsets = [0, 162], sizes = [8, 16], strides = [1, 1]} : vector<8x286xf32> to vector<8x16xf32>
    %c0_53 = arith.constant 0 : index
    %c0_54 = arith.constant 0 : index
    %c144 = arith.constant 144 : index
    %91 = vector.load %arg5[%c0_53, %c0_54, %c144] : memref<1x8x256xf32, #tpu.memory_space<vmem>>, vector<1x8x16xf32>
    %92 = vector.shape_cast %91 : vector<1x8x16xf32> to vector<8x16xf32>
    %93 = vector.shape_cast %90 : vector<8x16xf32> to vector<1x8x16xf32>
    tpu.vector_store %arg5[%c0_53, %c0_54, %c144], %93 {strides = array<i32>} : memref<1x8x256xf32, #tpu.memory_space<vmem>>, vector<1x8x16xf32>,
    %94 = vector.extract_strided_slice %53 {offsets = [0, 180], sizes = [8, 16], strides = [1, 1]} : vector<8x286xf32> to vector<8x16xf32>
    %c0_55 = arith.constant 0 : index
    %c0_56 = arith.constant 0 : index
    %c160 = arith.constant 160 : index
    %95 = vector.load %arg5[%c0_55, %c0_56, %c160] : memref<1x8x256xf32, #tpu.memory_space<vmem>>, vector<1x8x16xf32>
    %96 = vector.shape_cast %95 : vector<1x8x16xf32> to vector<8x16xf32>
    %97 = vector.shape_cast %94 : vector<8x16xf32> to vector<1x8x16xf32>
    tpu.vector_store %arg5[%c0_55, %c0_56, %c160], %97 {strides = array<i32>} : memref<1x8x256xf32, #tpu.memory_space<vmem>>, vector<1x8x16xf32>,
    %98 = vector.extract_strided_slice %53 {offsets = [0, 198], sizes = [8, 16], strides = [1, 1]} : vector<8x286xf32> to vector<8x16xf32>
    %c0_57 = arith.constant 0 : index
    %c0_58 = arith.constant 0 : index
    %c176 = arith.constant 176 : index
    %99 = vector.load %arg5[%c0_57, %c0_58, %c176] : memref<1x8x256xf32, #tpu.memory_space<vmem>>, vector<1x8x16xf32>
    %100 = vector.shape_cast %99 : vector<1x8x16xf32> to vector<8x16xf32>
    %101 = vector.shape_cast %98 : vector<8x16xf32> to vector<1x8x16xf32>
    tpu.vector_store %arg5[%c0_57, %c0_58, %c176], %101 {strides = array<i32>} : memref<1x8x256xf32, #tpu.memory_space<vmem>>, vector<1x8x16xf32>,
    %102 = vector.extract_strided_slice %53 {offsets = [0, 216], sizes = [8, 16], strides = [1, 1]} : vector<8x286xf32> to vector<8x16xf32>
    %c0_59 = arith.constant 0 : index
    %c0_60 = arith.constant 0 : index
    %c192 = arith.constant 192 : index
    %103 = vector.load %arg5[%c0_59, %c0_60, %c192] : memref<1x8x256xf32, #tpu.memory_space<vmem>>, vector<1x8x16xf32>
    %104 = vector.shape_cast %103 : vector<1x8x16xf32> to vector<8x16xf32>
    %105 = vector.shape_cast %102 : vector<8x16xf32> to vector<1x8x16xf32>
    tpu.vector_store %arg5[%c0_59, %c0_60, %c192], %105 {strides = array<i32>} : memref<1x8x256xf32, #tpu.memory_space<vmem>>, vector<1x8x16xf32>,
    %106 = vector.extract_strided_slice %53 {offsets = [0, 234], sizes = [8, 16], strides = [1, 1]} : vector<8x286xf32> to vector<8x16xf32>
    %c0_61 = arith.constant 0 : index
    %c0_62 = arith.constant 0 : index
    %c208 = arith.constant 208 : index
    %107 = vector.load %arg5[%c0_61, %c0_62, %c208] : memref<1x8x256xf32, #tpu.memory_space<vmem>>, vector<1x8x16xf32>
    %108 = vector.shape_cast %107 : vector<1x8x16xf32> to vector<8x16xf32>
    %109 = vector.shape_cast %106 : vector<8x16xf32> to vector<1x8x16xf32>
    tpu.vector_store %arg5[%c0_61, %c0_62, %c208], %109 {strides = array<i32>} : memref<1x8x256xf32, #tpu.memory_space<vmem>>, vector<1x8x16xf32>,
    %110 = vector.extract_strided_slice %53 {offsets = [0, 252], sizes = [8, 16], strides = [1, 1]} : vector<8x286xf32> to vector<8x16xf32>
    %c0_63 = arith.constant 0 : index
    %c0_64 = arith.constant 0 : index
    %c224 = arith.constant 224 : index
    %111 = vector.load %arg5[%c0_63, %c0_64, %c224] : memref<1x8x256xf32, #tpu.memory_space<vmem>>, vector<1x8x16xf32>
    %112 = vector.shape_cast %111 : vector<1x8x16xf32> to vector<8x16xf32>
    %113 = vector.shape_cast %110 : vector<8x16xf32> to vector<1x8x16xf32>
    tpu.vector_store %arg5[%c0_63, %c0_64, %c224], %113 {strides = array<i32>} : memref<1x8x256xf32, #tpu.memory_space<vmem>>, vector<1x8x16xf32>,
    %114 = vector.extract_strided_slice %53 {offsets = [0, 270], sizes = [8, 16], strides = [1, 1]} : vector<8x286xf32> to vector<8x16xf32>
    %c0_65 = arith.constant 0 : index
    %c0_66 = arith.constant 0 : index
    %c240 = arith.constant 240 : index
    %115 = vector.load %arg5[%c0_65, %c0_66, %c240] : memref<1x8x256xf32, #tpu.memory_space<vmem>>, vector<1x8x16xf32>
    %116 = vector.shape_cast %115 : vector<1x8x16xf32> to vector<8x16xf32>
    %117 = vector.shape_cast %114 : vector<8x16xf32> to vector<1x8x16xf32>
    tpu.vector_store %arg5[%c0_65, %c0_66, %c240], %117 {strides = array<i32>} : memref<1x8x256xf32, #tpu.memory_space<vmem>>, vector<1x8x16xf32>,
    return
  }
  func.func @transform_0(%arg0: i32) -> (i32, i32, i32) {
    %c0_i32 = arith.constant 0 : i32
    %c0_i32_0 = arith.constant 0 : i32
    %c0_i32_1 = arith.constant 0 : i32
    return %arg0, %c0_i32, %c0_i32_0 : i32, i32, i32
  }
  func.func @transform_1(%arg0: i32) -> (i32, i32, i32) {
    %c0_i32 = arith.constant 0 : i32
    %c0_i32_0 = arith.constant 0 : i32
    %c0_i32_1 = arith.constant 0 : i32
    %c0_i32_2 = arith.constant 0 : i32
    return %c0_i32, %c0_i32_0, %c0_i32_1 : i32, i32, i32
  }
  func.func @transform_2(%arg0: i32) -> (i32, i32) {
    %c0_i32 = arith.constant 0 : i32
    %c0_i32_0 = arith.constant 0 : i32
    %c0_i32_1 = arith.constant 0 : i32
    return %c0_i32, %c0_i32_0 : i32, i32
  }
  func.func @transform_3(%arg0: i32) -> (i32, i32) {
    %c0_i32 = arith.constant 0 : i32
    %c0_i32_0 = arith.constant 0 : i32
    %c0_i32_1 = arith.constant 0 : i32
    return %c0_i32, %c0_i32_0 : i32, i32
  }
  func.func @transform_4(%arg0: i32) -> (i32, i32, i32) {
    %c0_i32 = arith.constant 0 : i32
    %c0_i32_0 = arith.constant 0 : i32
    %c0_i32_1 = arith.constant 0 : i32
    return %arg0, %c0_i32, %c0_i32_0 : i32, i32, i32
  }
}

</mosaic_0001>

<llo_original>
// kernel: conv_forward.3
$region0: #{conv_forward.3}
  #allocation0 [shape = 'u32[]', space=smem, size = 0x4, offset = 0x4, fixed_abs, tag = 'smem constant byte address 0x4 - core index']
  #allocation1 [shape = 'u32[72,128]{1,0:T(1,128)}', space=vmem, size = 0x9000, scoped, tag = 'internal scratch']
  %s0 = inlined_call_operand.vmem [shape: bf16[2,4,324], index: 0, kind: input, shape index: {}]
  %s1 = inlined_call_operand.vmem [shape: bf16[9,8,4], index: 1, kind: input, shape index: {}]
  %s2 = inlined_call_operand.vmem [shape: f32[8,1], index: 2, kind: input, shape index: {}]
  %s3 = inlined_call_operand.vmem [shape: f32[8,1], index: 3, kind: input, shape index: {}]
  %s4 = inlined_call_operand.vmem [shape: f32[2,8,256], index: 4, kind: output, shape index: {}]
  %s5 = sld [smem:[#allocation0]]
  $region49: #{conv_forward.3} parent=0
    _
  %s7 = ssub.s32 1, %s5
  %s8 = scalar_select 0, %s7, %s5
  loop: start=0, step=1, limit=4
  $region2: #{conv_forward.3} parent=0 // loop_pre_header
    _
  $region3: #{conv_forward.3} parent=0 // loop_header
    %s10 = sphi 0, %s14
    %p11 = scmp.ge.s32.totalorder %s10, 4
    %s20 = sphi 0, %s22
    %s23 = sphi 0, %s20
    %s24 = sphi 0, %s23
    %s40 = sphi 0, %s24
    %s44 = sphi 0, %s44
    %s46 = sphi 0, %s44
    %s47 = sphi 0, %s46
    %s61 = sphi 0, %s47
    %s65 = sphi 0, %s65
    %s67 = sphi 0, %s65
    %s68 = sphi 0, %s67
    %s82 = sphi 0, %s68
    %s86 = sphi 0, %s86
    %s88 = sphi 0, %s86
    %s89 = sphi 0, %s88
    %s103 = sphi 0, %s89
    %s109 = sphi 0, %s111
    %s112 = sphi 0, %s109
    %s113 = sphi 0, %s112
    %s129 = sphi 0, %s113
  $region4: #{conv_forward.3} parent=0 // loop_header_branch
    %13 = sbr.rel (%p11) target = $region8
  $region5: #{conv_forward.3} parent=0 // loop_body
    %s15 = ssub.s32 %s10, 1
    %s16 = ssub.s32 %s10, 2
    %s17 = sadd.s32 %s10, 1
    %s18 = ssub.s32 %s10, %s17
    %p19 = scmp.eq.s32.totalorder %s18, 0
    %s21 = sadd.s32 %s20, 1
    %s22 = scalar_select %p19, %s20, %s21
    %p25 = pneg %p19
    %p26 = scmp.eq.s32.totalorder %s10, 1
    %p27 = por %p25, %p26
    %p28 = scmp.ne.s32.totalorder %s20, %s23
    %p29 = scmp.eq.s32.totalorder %s10, 0
    %p30 = por %p28, %p29
    %p31 = scmp.ne.s32.totalorder %s20, %s23
    %p32 = scmp.eq.s32.totalorder %s15, 1
    %p33 = por %p31, %p32
    %p34 = scmp.ne.s32.totalorder %s23, %s24
    %p35 = scmp.eq.s32.totalorder %s15, 0
    %p36 = por %p34, %p35
    %p37 = scmp.ne.s32.totalorder %s23, %s24
    %p38 = scmp.eq.s32.totalorder %s16, 1
    %p39 = por %p37, %p38
    %p41 = scmp.ne.s32.totalorder %s24, %s40
    %p42 = scmp.eq.s32.totalorder %s16, 0
    %p43 = por %p41, %p42
    %s45 = sadd.s32 %s44, 1
    %p48 = scmp.eq.s32.totalorder %s10, 1
    %p49 = scmp.ne.s32.totalorder %s44, %s46
    %p50 = scmp.eq.s32.totalorder %s10, 0
    %p51 = por %p49, %p50
    %p52 = scmp.ne.s32.totalorder %s44, %s46
    %p53 = scmp.eq.s32.totalorder %s15, 1
    %p54 = por %p52, %p53
    %p55 = scmp.ne.s32.totalorder %s46, %s47
    %p56 = scmp.eq.s32.totalorder %s15, 0
    %p57 = por %p55, %p56
    %p58 = scmp.ne.s32.totalorder %s46, %s47
    %p59 = scmp.eq.s32.totalorder %s16, 1
    %p60 = por %p58, %p59
    %p62 = scmp.ne.s32.totalorder %s47, %s61
    %p63 = scmp.eq.s32.totalorder %s16, 0
    %p64 = por %p62, %p63
    %s66 = sadd.s32 %s65, 1
    %p69 = scmp.eq.s32.totalorder %s10, 1
    %p70 = scmp.ne.s32.totalorder %s65, %s67
    %p71 = scmp.eq.s32.totalorder %s10, 0
    %p72 = por %p70, %p71
    %p73 = scmp.ne.s32.totalorder %s65, %s67
    %p74 = scmp.eq.s32.totalorder %s15, 1
    %p75 = por %p73, %p74
    %p76 = scmp.ne.s32.totalorder %s67, %s68
    %p77 = scmp.eq.s32.totalorder %s15, 0
    %p78 = por %p76, %p77
    %p79 = scmp.ne.s32.totalorder %s67, %s68
    %p80 = scmp.eq.s32.totalorder %s16, 1
    %p81 = por %p79, %p80
    %p83 = scmp.ne.s32.totalorder %s68, %s82
    %p84 = scmp.eq.s32.totalorder %s16, 0
    %p85 = por %p83, %p84
    %s87 = sadd.s32 %s86, 1
    %p90 = scmp.eq.s32.totalorder %s10, 1
    %p91 = scmp.ne.s32.totalorder %s86, %s88
    %p92 = scmp.eq.s32.totalorder %s10, 0
    %p93 = por %p91, %p92
    %p94 = scmp.ne.s32.totalorder %s86, %s88
    %p95 = scmp.eq.s32.totalorder %s15, 1
    %p96 = por %p94, %p95
    %p97 = scmp.ne.s32.totalorder %s88, %s89
    %p98 = scmp.eq.s32.totalorder %s15, 0
    %p99 = por %p97, %p98
    %p100 = scmp.ne.s32.totalorder %s88, %s89
    %p101 = scmp.eq.s32.totalorder %s16, 1
    %p102 = por %p100, %p101
    %p104 = scmp.ne.s32.totalorder %s89, %s103
    %p105 = scmp.eq.s32.totalorder %s16, 0
    %p106 = por %p104, %p105
    %s107 = ssub.s32 %s10, %s17
    %p108 = scmp.eq.s32.totalorder %s107, 0
    %s110 = sadd.s32 %s109, 1
    %s111 = scalar_select %p108, %s109, %s110
    %p114 = pneg %p108
    %p115 = scmp.eq.s32.totalorder %s10, 1
    %p116 = por %p114, %p115
    %p117 = scmp.ne.s32.totalorder %s109, %s112
    %p118 = scmp.eq.s32.totalorder %s10, 0
    %p119 = por %p117, %p118
    %p120 = scmp.ne.s32.totalorder %s109, %s112
    %p121 = scmp.eq.s32.totalorder %s15, 1
    %p122 = por %p120, %p121
    %p123 = scmp.ne.s32.totalorder %s112, %s113
    %p124 = scmp.eq.s32.totalorder %s15, 0
    %p125 = por %p123, %p124
    %p126 = scmp.ne.s32.totalorder %s112, %s113
    %p127 = scmp.eq.s32.totalorder %s16, 1
    %p128 = por %p126, %p127
    %p130 = scmp.ne.s32.totalorder %s113, %s129
    %p131 = scmp.eq.s32.totalorder %s16, 0
    %p132 = por %p130, %p131
    %p133 = scmp.le.s32.totalorder 1, %s10
    %p134 = scmp.lt.s32.totalorder %s10, 3
    %p135 = pnand %p133, %p134
    %p136 = pneg %p135
    // Predicated region
    $region9: #{conv_forward.3} parent=5 // pred_check
      _
    $region10: #{conv_forward.3} parent=5 // pred_check_branch
      %138 = sbr.rel (%p135) target = $region12
    $region11: #{conv_forward.3} parent=5 // pred_region
      %s139 = ssub.s32 %s10, 1
      // Predicated region
      $region13: #{conv_forward.3} parent=11 // pred_check
        %p140 = pneg %p57
      $region14: #{conv_forward.3} parent=11 // pred_check_branch
        %142 = sbr.rel (%p140) target = $region16
      $region15: #{conv_forward.3} parent=11 // pred_region
        _
      $region16: #{conv_forward.3} parent=11 // pred_fallthru
        _
      // Predicated region
      $region17: #{conv_forward.3} parent=11 // pred_check
        %p143 = pneg %p78
      $region18: #{conv_forward.3} parent=11 // pred_check_branch
        %145 = sbr.rel (%p143) target = $region20
      $region19: #{conv_forward.3} parent=11 // pred_region
        _
      $region20: #{conv_forward.3} parent=11 // pred_fallthru
        _
      // Predicated region
      $region21: #{conv_forward.3} parent=11 // pred_check
        %p146 = pneg %p99
      $region22: #{conv_forward.3} parent=11 // pred_check_branch
        %148 = sbr.rel (%p146) target = $region24
      $region23: #{conv_forward.3} parent=11 // pred_region
        _
      $region24: #{conv_forward.3} parent=11 // pred_fallthru
        _
    $region12: #{conv_forward.3} parent=5 // pred_fallthru
      _
    %p149 = scmp.lt.s32.totalorder %s10, 2
    // Predicated region
    $region25: #{conv_forward.3} parent=5 // pred_check
      %p150 = pneg %p149
    $region26: #{conv_forward.3} parent=5 // pred_check_branch
      %152 = sbr.rel (%p150) target = $region28
    $region27: #{conv_forward.3} parent=5 // pred_region
      // Predicated region
      $region29: #{conv_forward.3} parent=27 // pred_check
        %p153 = pneg %p30
      $region30: #{conv_forward.3} parent=27 // pred_check_branch
        %155 = sbr.rel (%p153) target = $region32
      $region31: #{conv_forward.3} parent=27 // pred_region
        %p156 = scmp.lt.s32.totalorder %s10, 1
        %s157 = scalar_select %p156, %s10, 1
        %s158 = smul.addr %s157, 3
        %s159 = smul.addr %s158, 2
        %s160 = scalar_lea.vmem %s0, %s159
      $region32: #{conv_forward.3} parent=27 // pred_fallthru
        _
    $region28: #{conv_forward.3} parent=5 // pred_fallthru
      _
    %p161 = scmp.le.s32.totalorder 1, %s10
    %p162 = scmp.lt.s32.totalorder %s10, 3
    %p163 = pnand %p161, %p162
    %p164 = pneg %p163
    // Predicated region
    $region33: #{conv_forward.3} parent=5 // pred_check
      _
    $region34: #{conv_forward.3} parent=5 // pred_check_branch
      %166 = sbr.rel (%p163) target = $region36
    $region35: #{conv_forward.3} parent=5 // pred_region
      %s167 = ssub.s32 %s10, 1
      %p168 = scmp.lt.s32.totalorder %s15, 1
      %s169 = scalar_select %p168, %s15, 1
      %s170 = smul.addr %s169, 3
      %s171 = smul.addr %s170, 2
      %s172 = scalar_lea.vmem %s0, %s171
      %p173 = pneg %p36
      %p174 = pneg %p33
      %p175 = pneg %p57
      %p176 = pneg %p54
      %p177 = pneg %p78
      %p178 = pneg %p75
      %p179 = pneg %p99
      %p180 = pneg %p96
      %p181 = pneg %p125
      %p182 = pneg %p122
      %p183 = scmp.lt.s32.totalorder %s15, 1
      %s184 = scalar_select %p183, %s15, 1
      %s185 = smul.addr %s184, 2
      %s186 = smul.addr %s185, 8
      %s187 = scalar_lea.vmem %s4, %s186
      %p188 = scmp.lt.s32.totalorder %s15, 1
      %s189 = scalar_select %p188, %s15, 1
      %s190 = smul.addr %s189, 3
      %s191 = smul.addr %s190, 2
      %s192 = scalar_lea.vmem %s0, %s191
      %p193 = scmp.lt.s32.totalorder %s15, 1
      %s194 = scalar_select %p193, %s15, 1
      %s195 = smul.addr %s194, 2
      %s196 = smul.addr %s195, 8
      %s197 = scalar_lea.vmem %s4, %s196
      %v199 = vld [vmem:[%s192] sm:$0x3f]
      %v200 = vld [vmem:[%s1] sm:$0xf]
      %s201 = scalar_lea.vmem %s1, 4
      %v202 = vld [vmem:[%s201] sm:$0xf]
      %204 = vst [vmem:[#allocation1] ss:$4 sm:$0xff] %v199
      %v205 = vld.sshfl [vmem:[#allocation1] sm:$0xff pattern:$0x73625140]
      %v207 = vld.sshfl [vmem:[#allocation1 + $0x8] sm:$0xff pattern:$0x73625140]
      %v209 = vld.sshfl [vmem:[#allocation1 + $0x10] sm:$0xff pattern:$0x73625140]
      %211 = vrot.lane.b32.xlu0 %v205, 127
      %v212 = vpop.permute.xlu0 %211
      %213 = vrot.lane.b32.xlu0 %v207, 127
      %v214 = vpop.permute.xlu0 %213
      %215 = vrot.lane.b32.xlu0 %v209, 127
      %v216 = vpop.permute.xlu0 %215
      %vm217 = vcmask 1039360
      %v218 = vsel %vm217, %v212, %v214
      %v219 = vsel %vm217, %v214, %v216
      %vm220 = vcmask 31744
      %v222 = vsel %vm220, %v202, 0
      %vm224 = vcmask 1041408
      %v226 = vsel %vm224, %v218, 0
      %v229 = vsel %vm224, %v219, 0
      %v232 = vsel %vm224, %v216, 0
      %234 = vmatpush.bf16.msra.mxu0 0
      %235 = vmatpush.bf16.msra.mxu0 0
      %236 = vmatpush.bf16.msra.mxu0 0
      %237 = vmatpush.bf16.msra.mxu0 0
      %238 = vmatpush.bf16.msra.mxu0 0
      %239 = vmatpush.bf16.msra.mxu0 0
      %240 = vmatpush.bf16.msra.mxu0 0
      %241 = vmatpush.bf16.msra.mxu0 %v226
      %242 = vmatmul.bf16.gmra.mxu0 %v222
      %v243 = vpop.f32.mrf.mxu0
      %v244 = vadd.f32 0.0, %v243
      %v245 = vpop.f32.mrf.mxu0
      %246 = vdwg.mxu0
      %247 = vmatpush.bf16.msra.mxu0 0
      %248 = vmatpush.bf16.msra.mxu0 0
      %249 = vmatpush.bf16.msra.mxu0 0
      %250 = vmatpush.bf16.msra.mxu0 0
      %251 = vmatpush.bf16.msra.mxu0 0
      %252 = vmatpush.bf16.msra.mxu0 0
      %253 = vmatpush.bf16.msra.mxu0 0
      %254 = vmatpush.bf16.msra.mxu0 %v229
      %255 = vmatmul.bf16.gmra.mxu0 %v222
      %v256 = vpop.f32.mrf.mxu0
      %v257 = vadd.f32 0.0, %v256
      %v258 = vpop.f32.mrf.mxu0
      %259 = vdwg.mxu0
      %260 = vmatpush.bf16.msra.mxu0 0
      %261 = vmatpush.bf16.msra.mxu0 0
      %262 = vmatpush.bf16.msra.mxu0 0
      %263 = vmatpush.bf16.msra.mxu0 0
      %264 = vmatpush.bf16.msra.mxu0 0
      %265 = vmatpush.bf16.msra.mxu0 0
      %266 = vmatpush.bf16.msra.mxu0 0
      %267 = vmatpush.bf16.msra.mxu0 %v232
      %268 = vmatmul.bf16.gmra.mxu0 %v222
      %v269 = vpop.f32.mrf.mxu0
      %v270 = vadd.f32 0.0, %v269
      %v271 = vpop.f32.mrf.mxu0
      %272 = vdwg.mxu0
      %273 = vst [vmem:[#allocation1] ss:$4 sm:$0xff] %v199
      %v274 = vld.sshfl [vmem:[#allocation1] sm:$0xff pattern:$0x73625140]
      %v275 = vld.sshfl [vmem:[#allocation1 + $0x8] sm:$0xff pattern:$0x73625140]
      %v276 = vld.sshfl [vmem:[#allocation1 + $0x10] sm:$0xff pattern:$0x73625140]
      %v278 = vsel %vm220, %v200, 0
      %v280 = vsel %vm224, %v274, 0
      %v282 = vsel %vm224, %v275, 0
      %v284 = vsel %vm224, %v276, 0
      %286 = vmatpush.bf16.msra.mxu0 0
      %287 = vmatpush.bf16.msra.mxu0 0
      %288 = vmatpush.bf16.msra.mxu0 0
      %289 = vmatpush.bf16.msra.mxu0 0
      %290 = vmatpush.bf16.msra.mxu0 0
      %291 = vmatpush.bf16.msra.mxu0 0
      %292 = vmatpush.bf16.msra.mxu0 0
      %293 = vmatpush.bf16.msra.mxu0 %v280
      %294 = vmatmul.bf16.gmra.mxu0 %v278
      %v295 = vpop.f32.mrf.mxu0
      %v296 = vadd.f32 %v244, %v295
      %v297 = vpop.f32.mrf.mxu0
      %298 = vdwg.mxu0
      %299 = vmatpush.bf16.msra.mxu0 0
      %300 = vmatpush.bf16.msra.mxu0 0
      %301 = vmatpush.bf16.msra.mxu0 0
      %302 = vmatpush.bf16.msra.mxu0 0
      %303 = vmatpush.bf16.msra.mxu0 0
      %304 = vmatpush.bf16.msra.mxu0 0
      %305 = vmatpush.bf16.msra.mxu0 0
      %306 = vmatpush.bf16.msra.mxu0 %v282
      %307 = vmatmul.bf16.gmra.mxu0 %v278
      %v308 = vpop.f32.mrf.mxu0
      %v309 = vadd.f32 %v257, %v308
      %v310 = vpop.f32.mrf.mxu0
      %311 = vdwg.mxu0
      %312 = vmatpush.bf16.msra.mxu0 0
      %313 = vmatpush.bf16.msra.mxu0 0
      %314 = vmatpush.bf16.msra.mxu0 0
      %315 = vmatpush.bf16.msra.mxu0 0
      %316 = vmatpush.bf16.msra.mxu0 0
      %317 = vmatpush.bf16.msra.mxu0 0
      %318 = vmatpush.bf16.msra.mxu0 0
      %319 = vmatpush.bf16.msra.mxu0 %v284
      %320 = vmatmul.bf16.gmra.mxu0 %v278
      %v321 = vpop.f32.mrf.mxu0
      %v322 = vadd.f32 %v270, %v321
      %v323 = vpop.f32.mrf.mxu0
      %324 = vdwg.mxu0
      %s325 = scalar_lea.vmem %s1, 8
      %v326 = vld [vmem:[%s325] sm:$0xf]
      %327 = vst [vmem:[#allocation1] ss:$4 sm:$0xff] %v199
      %v328 = vld.sshfl [vmem:[#allocation1] sm:$0xff pattern:$0x73625140]
      %v330 = vld.sshfl [vmem:[#allocation1 + $0x8] sm:$0xff pattern:$0x73625140]
      %v332 = vld.sshfl [vmem:[#allocation1 + $0x10] sm:$0xff pattern:$0x73625140]
      %334 = vrot.lane.b32.xlu0 %v328, 126
      %v335 = vpop.permute.xlu0 %334
      %336 = vrot.lane.b32.xlu0 %v330, 126
      %v337 = vpop.permute.xlu0 %336
      %338 = vrot.lane.b32.xlu0 %v332, 126
      %v339 = vpop.permute.xlu0 %338
      %vm340 = vcmask 1031168
      %v341 = vsel %vm340, %v335, %v337
      %v342 = vsel %vm340, %v337, %v339
      %v344 = vsel %vm220, %v326, 0
      %v347 = vsel %vm224, %v341, 0
      %v350 = vsel %vm224, %v342, 0
      %v353 = vsel %vm224, %v339, 0
      %355 = vmatpush.bf16.msra.mxu0 0
      %356 = vmatpush.bf16.msra.mxu0 0
      %357 = vmatpush.bf16.msra.mxu0 0
      %358 = vmatpush.bf16.msra.mxu0 0
      %359 = vmatpush.bf16.msra.mxu0 0
      %360 = vmatpush.bf16.msra.mxu0 0
      %361 = vmatpush.bf16.msra.mxu0 0
      %362 = vmatpush.bf16.msra.mxu0 %v347
      %363 = vmatmul.bf16.gmra.mxu0 %v344
      %v364 = vpop.f32.mrf.mxu0
      %v365 = vadd.f32 0.0, %v364
      %v366 = vpop.f32.mrf.mxu0
      %367 = vdwg.mxu0
      %368 = vmatpush.bf16.msra.mxu0 0
      %369 = vmatpush.bf16.msra.mxu0 0
      %370 = vmatpush.bf16.msra.mxu0 0
      %371 = vmatpush.bf16.msra.mxu0 0
      %372 = vmatpush.bf16.msra.mxu0 0
      %373 = vmatpush.bf16.msra.mxu0 0
      %374 = vmatpush.bf16.msra.mxu0 0
      %375 = vmatpush.bf16.msra.mxu0 %v350
      %376 = vmatmul.bf16.gmra.mxu0 %v344
      %v377 = vpop.f32.mrf.mxu0
      %v378 = vadd.f32 0.0, %v377
      %v379 = vpop.f32.mrf.mxu0
      %380 = vdwg.mxu0
      %381 = vmatpush.bf16.msra.mxu0 0
      %382 = vmatpush.bf16.msra.mxu0 0
      %383 = vmatpush.bf16.msra.mxu0 0
      %384 = vmatpush.bf16.msra.mxu0 0
      %385 = vmatpush.bf16.msra.mxu0 0
      %386 = vmatpush.bf16.msra.mxu0 0
      %387 = vmatpush.bf16.msra.mxu0 0
      %388 = vmatpush.bf16.msra.mxu0 %v353
      %389 = vmatmul.bf16.gmra.mxu0 %v344
      %v390 = vpop.f32.mrf.mxu0
      %v391 = vadd.f32 0.0, %v390
      %v392 = vpop.f32.mrf.mxu0
      %393 = vdwg.mxu0
      %v394 = vadd.f32 %v296, %v365
      %v395 = vadd.f32 %v309, %v378
      %v396 = vadd.f32 %v322, %v391
      %s397 = scalar_lea.vmem %s1, 12
      %v398 = vld [vmem:[%s397] sm:$0xf]
      %399 = vst [vmem:[#allocation1] ss:$4 sm:$0xff] %v199
      %v400 = vld.sshfl [vmem:[#allocation1] sm:$0xff pattern:$0x73625140]
      %v402 = vld.sshfl [vmem:[#allocation1 + $0x8] sm:$0xff pattern:$0x73625140]
      %v404 = vld.sshfl [vmem:[#allocation1 + $0x10] sm:$0xff pattern:$0x73625140]
      %406 = vrot.lane.b32.xlu0 %v400, 110
      %v407 = vpop.permute.xlu0 %406
      %408 = vrot.lane.b32.xlu0 %v402, 110
      %v409 = vpop.permute.xlu0 %408
      %410 = vrot.lane.b32.xlu0 %v404, 110
      %v411 = vpop.permute.xlu0 %410
      %vm412 = vcmask 900096
      %v413 = vsel %vm412, %v407, %v409
      %v414 = vsel %vm412, %v409, %v411
      %v416 = vsel %vm220, %v398, 0
      %v419 = vsel %vm224, %v413, 0
      %v422 = vsel %vm224, %v414, 0
      %v425 = vsel %vm224, %v411, 0
      %427 = vmatpush.bf16.msra.mxu0 0
      %428 = vmatpush.bf16.msra.mxu0 0
      %429 = vmatpush.bf16.msra.mxu0 0
      %430 = vmatpush.bf16.msra.mxu0 0
      %431 = vmatpush.bf16.msra.mxu0 0
      %432 = vmatpush.bf16.msra.mxu0 0
      %433 = vmatpush.bf16.msra.mxu0 0
      %434 = vmatpush.bf16.msra.mxu0 %v419
      %435 = vmatmul.bf16.gmra.mxu0 %v416
      %v436 = vpop.f32.mrf.mxu0
      %v437 = vadd.f32 0.0, %v436
      %v438 = vpop.f32.mrf.mxu0
      %439 = vdwg.mxu0
      %440 = vmatpush.bf16.msra.mxu0 0
      %441 = vmatpush.bf16.msra.mxu0 0
      %442 = vmatpush.bf16.msra.mxu0 0
      %443 = vmatpush.bf16.msra.mxu0 0
      %444 = vmatpush.bf16.msra.mxu0 0
      %445 = vmatpush.bf16.msra.mxu0 0
      %446 = vmatpush.bf16.msra.mxu0 0
      %447 = vmatpush.bf16.msra.mxu0 %v422
      %448 = vmatmul.bf16.gmra.mxu0 %v416
      %v449 = vpop.f32.mrf.mxu0
      %v450 = vadd.f32 0.0, %v449
      %v451 = vpop.f32.mrf.mxu0
      %452 = vdwg.mxu0
      %453 = vmatpush.bf16.msra.mxu0 0
      %454 = vmatpush.bf16.msra.mxu0 0
      %455 = vmatpush.bf16.msra.mxu0 0
      %456 = vmatpush.bf16.msra.mxu0 0
      %457 = vmatpush.bf16.msra.mxu0 0
      %458 = vmatpush.bf16.msra.mxu0 0
      %459 = vmatpush.bf16.msra.mxu0 0
      %460 = vmatpush.bf16.msra.mxu0 %v425
      %461 = vmatmul.bf16.gmra.mxu0 %v416
      %v462 = vpop.f32.mrf.mxu0
      %v463 = vadd.f32 0.0, %v462
      %v464 = vpop.f32.mrf.mxu0
      %465 = vdwg.mxu0
      %v466 = vadd.f32 %v394, %v437
      %v467 = vadd.f32 %v395, %v450
      %v468 = vadd.f32 %v396, %v463
      %s469 = scalar_lea.vmem %s1, 16
      %v470 = vld [vmem:[%s469] sm:$0xf]
      %471 = vst [vmem:[#allocation1] ss:$4 sm:$0xff] %v199
      %v472 = vld.sshfl [vmem:[#allocation1] sm:$0xff pattern:$0x73625140]
      %v474 = vld.sshfl [vmem:[#allocation1 + $0x8] sm:$0xff pattern:$0x73625140]
      %v476 = vld.sshfl [vmem:[#allocation1 + $0x10] sm:$0xff pattern:$0x73625140]
      %478 = vrot.lane.b32.xlu0 %v472, 109
      %v479 = vpop.permute.xlu0 %478
      %480 = vrot.lane.b32.xlu0 %v474, 109
      %v481 = vpop.permute.xlu0 %480
      %482 = vrot.lane.b32.xlu0 %v476, 109
      %v483 = vpop.permute.xlu0 %482
      %vm484 = vcmask 891904
      %v485 = vsel %vm484, %v479, %v481
      %v486 = vsel %vm484, %v481, %v483
      %v488 = vsel %vm220, %v470, 0
      %v491 = vsel %vm224, %v485, 0
      %v494 = vsel %vm224, %v486, 0
      %v497 = vsel %vm224, %v483, 0
      %499 = vmatpush.bf16.msra.mxu0 0
      %500 = vmatpush.bf16.msra.mxu0 0
      %501 = vmatpush.bf16.msra.mxu0 0
      %502 = vmatpush.bf16.msra.mxu0 0
      %503 = vmatpush.bf16.msra.mxu0 0
      %504 = vmatpush.bf16.msra.mxu0 0
      %505 = vmatpush.bf16.msra.mxu0 0
      %506 = vmatpush.bf16.msra.mxu0 %v491
      %507 = vmatmul.bf16.gmra.mxu0 %v488
      %v508 = vpop.f32.mrf.mxu0
      %v509 = vadd.f32 0.0, %v508
      %v510 = vpop.f32.mrf.mxu0
      %511 = vdwg.mxu0
      %512 = vmatpush.bf16.msra.mxu0 0
      %513 = vmatpush.bf16.msra.mxu0 0
      %514 = vmatpush.bf16.msra.mxu0 0
      %515 = vmatpush.bf16.msra.mxu0 0
      %516 = vmatpush.bf16.msra.mxu0 0
      %517 = vmatpush.bf16.msra.mxu0 0
      %518 = vmatpush.bf16.msra.mxu0 0
      %519 = vmatpush.bf16.msra.mxu0 %v494
      %520 = vmatmul.bf16.gmra.mxu0 %v488
      %v521 = vpop.f32.mrf.mxu0
      %v522 = vadd.f32 0.0, %v521
      %v523 = vpop.f32.mrf.mxu0
      %524 = vdwg.mxu0
      %525 = vmatpush.bf16.msra.mxu0 0
      %526 = vmatpush.bf16.msra.mxu0 0
      %527 = vmatpush.bf16.msra.mxu0 0
      %528 = vmatpush.bf16.msra.mxu0 0
      %529 = vmatpush.bf16.msra.mxu0 0
      %530 = vmatpush.bf16.msra.mxu0 0
      %531 = vmatpush.bf16.msra.mxu0 0
      %532 = vmatpush.bf16.msra.mxu0 %v497
      %533 = vmatmul.bf16.gmra.mxu0 %v488
      %v534 = vpop.f32.mrf.mxu0
      %v535 = vadd.f32 0.0, %v534
      %v536 = vpop.f32.mrf.mxu0
      %537 = vdwg.mxu0
      %v538 = vadd.f32 %v466, %v509
      %v539 = vadd.f32 %v467, %v522
      %v540 = vadd.f32 %v468, %v535
      %s541 = scalar_lea.vmem %s1, 20
      %v542 = vld [vmem:[%s541] sm:$0xf]
      %543 = vst [vmem:[#allocation1] ss:$4 sm:$0xff] %v199
      %v544 = vld.sshfl [vmem:[#allocation1] sm:$0xff pattern:$0x73625140]
      %v546 = vld.sshfl [vmem:[#allocation1 + $0x8] sm:$0xff pattern:$0x73625140]
      %v548 = vld.sshfl [vmem:[#allocation1 + $0x10] sm:$0xff pattern:$0x73625140]
      %550 = vrot.lane.b32.xlu0 %v544, 108
      %v551 = vpop.permute.xlu0 %550
      %552 = vrot.lane.b32.xlu0 %v546, 108
      %v553 = vpop.permute.xlu0 %552
      %554 = vrot.lane.b32.xlu0 %v548, 108
      %v555 = vpop.permute.xlu0 %554
      %vm556 = vcmask 883712
      %v557 = vsel %vm556, %v551, %v553
      %v558 = vsel %vm556, %v553, %v555
      %v560 = vsel %vm220, %v542, 0
      %v563 = vsel %vm224, %v557, 0
      %v566 = vsel %vm224, %v558, 0
      %v569 = vsel %vm224, %v555, 0
      %571 = vmatpush.bf16.msra.mxu0 0
      %572 = vmatpush.bf16.msra.mxu0 0
      %573 = vmatpush.bf16.msra.mxu0 0
      %574 = vmatpush.bf16.msra.mxu0 0
      %575 = vmatpush.bf16.msra.mxu0 0
      %576 = vmatpush.bf16.msra.mxu0 0
      %577 = vmatpush.bf16.msra.mxu0 0
      %578 = vmatpush.bf16.msra.mxu0 %v563
      %579 = vmatmul.bf16.gmra.mxu0 %v560
      %v580 = vpop.f32.mrf.mxu0
      %v581 = vadd.f32 0.0, %v580
      %v582 = vpop.f32.mrf.mxu0
      %583 = vdwg.mxu0
      %584 = vmatpush.bf16.msra.mxu0 0
      %585 = vmatpush.bf16.msra.mxu0 0
      %586 = vmatpush.bf16.msra.mxu0 0
      %587 = vmatpush.bf16.msra.mxu0 0
      %588 = vmatpush.bf16.msra.mxu0 0
      %589 = vmatpush.bf16.msra.mxu0 0
      %590 = vmatpush.bf16.msra.mxu0 0
      %591 = vmatpush.bf16.msra.mxu0 %v566
      %592 = vmatmul.bf16.gmra.mxu0 %v560
      %v593 = vpop.f32.mrf.mxu0
      %v594 = vadd.f32 0.0, %v593
      %v595 = vpop.f32.mrf.mxu0
      %596 = vdwg.mxu0
      %597 = vmatpush.bf16.msra.mxu0 0
      %598 = vmatpush.bf16.msra.mxu0 0
      %599 = vmatpush.bf16.msra.mxu0 0
      %600 = vmatpush.bf16.msra.mxu0 0
      %601 = vmatpush.bf16.msra.mxu0 0
      %602 = vmatpush.bf16.msra.mxu0 0
      %603 = vmatpush.bf16.msra.mxu0 0
      %604 = vmatpush.bf16.msra.mxu0 %v569
      %605 = vmatmul.bf16.gmra.mxu0 %v560
      %v606 = vpop.f32.mrf.mxu0
      %v607 = vadd.f32 0.0, %v606
      %v608 = vpop.f32.mrf.mxu0
      %609 = vdwg.mxu0
      %v610 = vadd.f32 %v538, %v581
      %v611 = vadd.f32 %v539, %v594
      %v612 = vadd.f32 %v540, %v607
      %s613 = scalar_lea.vmem %s1, 24
      %v614 = vld [vmem:[%s613] sm:$0xf]
      %615 = vst [vmem:[#allocation1] ss:$4 sm:$0xff] %v199
      %v616 = vld.sshfl [vmem:[#allocation1] sm:$0xff pattern:$0x73625140]
      %v618 = vld.sshfl [vmem:[#allocation1 + $0x8] sm:$0xff pattern:$0x73625140]
      %v620 = vld.sshfl [vmem:[#allocation1 + $0x10] sm:$0xff pattern:$0x73625140]
      %622 = vrot.lane.b32.xlu0 %v616, 92
      %v623 = vpop.permute.xlu0 %622
      %624 = vrot.lane.b32.xlu0 %v618, 92
      %v625 = vpop.permute.xlu0 %624
      %626 = vrot.lane.b32.xlu0 %v620, 92
      %v627 = vpop.permute.xlu0 %626
      %vm628 = vcmask 752640
      %v629 = vsel %vm628, %v623, %v625
      %v630 = vsel %vm628, %v625, %v627
      %v632 = vsel %vm220, %v614, 0
      %v635 = vsel %vm224, %v629, 0
      %v638 = vsel %vm224, %v630, 0
      %v641 = vsel %vm224, %v627, 0
      %643 = vmatpush.bf16.msra.mxu0 0
      %644 = vmatpush.bf16.msra.mxu0 0
      %645 = vmatpush.bf16.msra.mxu0 0
      %646 = vmatpush.bf16.msra.mxu0 0
      %647 = vmatpush.bf16.msra.mxu0 0
      %648 = vmatpush.bf16.msra.mxu0 0
      %649 = vmatpush.bf16.msra.mxu0 0
      %650 = vmatpush.bf16.msra.mxu0 %v635
      %651 = vmatmul.bf16.gmra.mxu0 %v632
      %v652 = vpop.f32.mrf.mxu0
      %v653 = vadd.f32 0.0, %v652
      %v654 = vpop.f32.mrf.mxu0
      %655 = vdwg.mxu0
      %656 = vmatpush.bf16.msra.mxu0 0
      %657 = vmatpush.bf16.msra.mxu0 0
      %658 = vmatpush.bf16.msra.mxu0 0
      %659 = vmatpush.bf16.msra.mxu0 0
      %660 = vmatpush.bf16.msra.mxu0 0
      %661 = vmatpush.bf16.msra.mxu0 0
      %662 = vmatpush.bf16.msra.mxu0 0
      %663 = vmatpush.bf16.msra.mxu0 %v638
      %664 = vmatmul.bf16.gmra.mxu0 %v632
      %v665 = vpop.f32.mrf.mxu0
      %v666 = vadd.f32 0.0, %v665
      %v667 = vpop.f32.mrf.mxu0
      %668 = vdwg.mxu0
      %669 = vmatpush.bf16.msra.mxu0 0
      %670 = vmatpush.bf16.msra.mxu0 0
      %671 = vmatpush.bf16.msra.mxu0 0
      %672 = vmatpush.bf16.msra.mxu0 0
      %673 = vmatpush.bf16.msra.mxu0 0
      %674 = vmatpush.bf16.msra.mxu0 0
      %675 = vmatpush.bf16.msra.mxu0 0
      %676 = vmatpush.bf16.msra.mxu0 %v641
      %677 = vmatmul.bf16.gmra.mxu0 %v632
      %v678 = vpop.f32.mrf.mxu0
      %v679 = vadd.f32 0.0, %v678
      %v680 = vpop.f32.mrf.mxu0
      %681 = vdwg.mxu0
      %v682 = vadd.f32 %v610, %v653
      %v683 = vadd.f32 %v611, %v666
      %v684 = vadd.f32 %v612, %v679
      %s685 = scalar_lea.vmem %s1, 28
      %v686 = vld [vmem:[%s685] sm:$0xf]
      %687 = vst [vmem:[#allocation1] ss:$4 sm:$0xff] %v199
      %v688 = vld.sshfl [vmem:[#allocation1] sm:$0xff pattern:$0x73625140]
      %v690 = vld.sshfl [vmem:[#allocation1 + $0x8] sm:$0xff pattern:$0x73625140]
      %v692 = vld.sshfl [vmem:[#allocation1 + $0x10] sm:$0xff pattern:$0x73625140]
      %694 = vrot.lane.b32.xlu0 %v688, 91
      %v695 = vpop.permute.xlu0 %694
      %696 = vrot.lane.b32.xlu0 %v690, 91
      %v697 = vpop.permute.xlu0 %696
      %698 = vrot.lane.b32.xlu0 %v692, 91
      %v699 = vpop.permute.xlu0 %698
      %vm700 = vcmask 744448
      %v701 = vsel %vm700, %v695, %v697
      %v702 = vsel %vm700, %v697, %v699
      %v704 = vsel %vm220, %v686, 0
      %v707 = vsel %vm224, %v701, 0
      %v710 = vsel %vm224, %v702, 0
      %v713 = vsel %vm224, %v699, 0
      %715 = vmatpush.bf16.msra.mxu0 0
      %716 = vmatpush.bf16.msra.mxu0 0
      %717 = vmatpush.bf16.msra.mxu0 0
      %718 = vmatpush.bf16.msra.mxu0 0
      %719 = vmatpush.bf16.msra.mxu0 0
      %720 = vmatpush.bf16.msra.mxu0 0
      %721 = vmatpush.bf16.msra.mxu0 0
      %722 = vmatpush.bf16.msra.mxu0 %v707
      %723 = vmatmul.bf16.gmra.mxu0 %v704
      %v724 = vpop.f32.mrf.mxu0
      %v725 = vadd.f32 0.0, %v724
      %v726 = vpop.f32.mrf.mxu0
      %727 = vdwg.mxu0
      %728 = vmatpush.bf16.msra.mxu0 0
      %729 = vmatpush.bf16.msra.mxu0 0
      %730 = vmatpush.bf16.msra.mxu0 0
      %731 = vmatpush.bf16.msra.mxu0 0
      %732 = vmatpush.bf16.msra.mxu0 0
      %733 = vmatpush.bf16.msra.mxu0 0
      %734 = vmatpush.bf16.msra.mxu0 0
      %735 = vmatpush.bf16.msra.mxu0 %v710
      %736 = vmatmul.bf16.gmra.mxu0 %v704
      %v737 = vpop.f32.mrf.mxu0
      %v738 = vadd.f32 0.0, %v737
      %v739 = vpop.f32.mrf.mxu0
      %740 = vdwg.mxu0
      %741 = vmatpush.bf16.msra.mxu0 0
      %742 = vmatpush.bf16.msra.mxu0 0
      %743 = vmatpush.bf16.msra.mxu0 0
      %744 = vmatpush.bf16.msra.mxu0 0
      %745 = vmatpush.bf16.msra.mxu0 0
      %746 = vmatpush.bf16.msra.mxu0 0
      %747 = vmatpush.bf16.msra.mxu0 0
      %748 = vmatpush.bf16.msra.mxu0 %v713
      %749 = vmatmul.bf16.gmra.mxu0 %v704
      %v750 = vpop.f32.mrf.mxu0
      %v751 = vadd.f32 0.0, %v750
      %v752 = vpop.f32.mrf.mxu0
      %753 = vdwg.mxu0
      %v754 = vadd.f32 %v682, %v725
      %v755 = vadd.f32 %v683, %v738
      %v756 = vadd.f32 %v684, %v751
      %s757 = scalar_lea.vmem %s1, 32
      %v758 = vld [vmem:[%s757] sm:$0xf]
      %759 = vst [vmem:[#allocation1] ss:$4 sm:$0xff] %v199
      %v760 = vld.sshfl [vmem:[#allocation1] sm:$0xff pattern:$0x73625140]
      %v762 = vld.sshfl [vmem:[#allocation1 + $0x8] sm:$0xff pattern:$0x73625140]
      %v764 = vld.sshfl [vmem:[#allocation1 + $0x10] sm:$0xff pattern:$0x73625140]
      %766 = vrot.lane.b32.xlu0 %v760, 90
      %v767 = vpop.permute.xlu0 %766
      %768 = vrot.lane.b32.xlu0 %v762, 90
      %v769 = vpop.permute.xlu0 %768
      %770 = vrot.lane.b32.xlu0 %v764, 90
      %v771 = vpop.permute.xlu0 %770
      %vm772 = vcmask 736256
      %v773 = vsel %vm772, %v767, %v769
      %v774 = vsel %vm772, %v769, %v771
      %v776 = vsel %vm220, %v758, 0
      %v779 = vsel %vm224, %v773, 0
      %v782 = vsel %vm224, %v774, 0
      %v785 = vsel %vm224, %v771, 0
      %787 = vmatpush.bf16.msra.mxu0 0
      %788 = vmatpush.bf16.msra.mxu0 0
      %789 = vmatpush.bf16.msra.mxu0 0
      %790 = vmatpush.bf16.msra.mxu0 0
      %791 = vmatpush.bf16.msra.mxu0 0
      %792 = vmatpush.bf16.msra.mxu0 0
      %793 = vmatpush.bf16.msra.mxu0 0
      %794 = vmatpush.bf16.msra.mxu0 %v779
      %795 = vmatmul.bf16.gmra.mxu0 %v776
      %v796 = vpop.f32.mrf.mxu0
      %v797 = vadd.f32 0.0, %v796
      %v798 = vpop.f32.mrf.mxu0
      %799 = vdwg.mxu0
      %800 = vmatpush.bf16.msra.mxu0 0
      %801 = vmatpush.bf16.msra.mxu0 0
      %802 = vmatpush.bf16.msra.mxu0 0
      %803 = vmatpush.bf16.msra.mxu0 0
      %804 = vmatpush.bf16.msra.mxu0 0
      %805 = vmatpush.bf16.msra.mxu0 0
      %806 = vmatpush.bf16.msra.mxu0 0
      %807 = vmatpush.bf16.msra.mxu0 %v782
      %808 = vmatmul.bf16.gmra.mxu0 %v776
      %v809 = vpop.f32.mrf.mxu0
      %v810 = vadd.f32 0.0, %v809
      %v811 = vpop.f32.mrf.mxu0
      %812 = vdwg.mxu0
      %813 = vmatpush.bf16.msra.mxu0 0
      %814 = vmatpush.bf16.msra.mxu0 0
      %815 = vmatpush.bf16.msra.mxu0 0
      %816 = vmatpush.bf16.msra.mxu0 0
      %817 = vmatpush.bf16.msra.mxu0 0
      %818 = vmatpush.bf16.msra.mxu0 0
      %819 = vmatpush.bf16.msra.mxu0 0
      %820 = vmatpush.bf16.msra.mxu0 %v785
      %821 = vmatmul.bf16.gmra.mxu0 %v776
      %v822 = vpop.f32.mrf.mxu0
      %v823 = vadd.f32 0.0, %v822
      %v824 = vpop.f32.mrf.mxu0
      %825 = vdwg.mxu0
      %v826 = vadd.f32 %v754, %v797
      %v827 = vadd.f32 %v755, %v810
      %v828 = vadd.f32 %v756, %v823
      %v829 = vld [vmem:[%s2] sm:$0xff]
      %831 = vset.pattern.permute.xlu0 0
      %832 = vperm.xlu0 %831, %v829
      %v833 = vpop.permute.xlu0 %832
      %v835 = vmul.f32 %v826, %v833
      %v836 = vmul.f32 %v827, %v833
      %v837 = vmul.f32 %v828, %v833
      %v838 = vld [vmem:[%s3] sm:$0xff]
      %840 = vset.pattern.permute.xlu0 0
      %841 = vperm.xlu0 %840, %v838
      %v842 = vpop.permute.xlu0 %841
      %v844 = vadd.f32 %v835, %v842
      %v845 = vadd.f32 %v836, %v842
      %v846 = vadd.f32 %v837, %v842
      %v847 = vmax.f32 %v844, 0.0
      %v848 = vmax.f32 %v845, 0.0
      %v849 = vmax.f32 %v846, 0.0
      %vm850 = vcmask 130048
      %851 = vst.msk [vmem:[%s197] sm:$0xff] %vm850, %v847
      %853 = vrot.lane.b32.xlu0 %v847, 126
      %v854 = vpop.permute.xlu0 %853
      %vm856 = vcmask 261248
      %857 = vst.msk [vmem:[%s197] sm:$0xff] %vm856, %v854
      %858 = vrot.lane.b32.xlu0 %v847, 124
      %v859 = vpop.permute.xlu0 %858
      %vm861 = vcmask 392448
      %862 = vst.msk [vmem:[%s197] sm:$0xff] %vm861, %v859
      %863 = vrot.lane.b32.xlu0 %v847, 122
      %v864 = vpop.permute.xlu0 %863
      %vm866 = vcmask 523648
      %867 = vst.msk [vmem:[%s197] sm:$0xff] %vm866, %v864
      %868 = vrot.lane.b32.xlu0 %v847, 120
      %v869 = vpop.permute.xlu0 %868
      %vm871 = vcmask 654848
      %872 = vst.msk [vmem:[%s197] sm:$0xff] %vm871, %v869
      %873 = vrot.lane.b32.xlu0 %v847, 118
      %v874 = vpop.permute.xlu0 %873
      %vm876 = vcmask 786048
      %877 = vst.msk [vmem:[%s197] sm:$0xff] %vm876, %v874
      %878 = vrot.lane.b32.xlu0 %v847, 116
      %v879 = vpop.permute.xlu0 %878
      %vm881 = vcmask 917248
      %882 = vst.msk [vmem:[%s197] sm:$0xff] %vm881, %v879
      %884 = vrot.lane.b32.xlu0 %v847, 114
      %v885 = vpop.permute.xlu0 %884
      %886 = vrot.lane.b32.xlu0 %v848, 114
      %v887 = vpop.permute.xlu0 %886
      %vm888 = vcmask 932864
      %v889 = vsel %vm888, %v885, %v887
      %vm891 = vcmask 1048448
      %892 = vst.msk [vmem:[%s197] sm:$0xff] %vm891, %v889
      %893 = vrot.lane.b32.xlu0 %v848, 112
      %v894 = vpop.permute.xlu0 %893
      %896 = vst.msk [vmem:[%s197 + $0x8] sm:$0xff] %vm850, %v894
      %897 = vrot.lane.b32.xlu0 %v848, 110
      %v898 = vpop.permute.xlu0 %897
      %900 = vst.msk [vmem:[%s197 + $0x8] sm:$0xff] %vm856, %v898
      %901 = vrot.lane.b32.xlu0 %v848, 108
      %v902 = vpop.permute.xlu0 %901
      %904 = vst.msk [vmem:[%s197 + $0x8] sm:$0xff] %vm861, %v902
      %905 = vrot.lane.b32.xlu0 %v848, 106
      %v906 = vpop.permute.xlu0 %905
      %908 = vst.msk [vmem:[%s197 + $0x8] sm:$0xff] %vm866, %v906
      %909 = vrot.lane.b32.xlu0 %v848, 104
      %v910 = vpop.permute.xlu0 %909
      %912 = vst.msk [vmem:[%s197 + $0x8] sm:$0xff] %vm871, %v910
      %913 = vrot.lane.b32.xlu0 %v848, 102
      %v914 = vpop.permute.xlu0 %913
      %916 = vst.msk [vmem:[%s197 + $0x8] sm:$0xff] %vm876, %v914
      %918 = vrot.lane.b32.xlu0 %v848, 100
      %v919 = vpop.permute.xlu0 %918
      %920 = vrot.lane.b32.xlu0 %v849, 100
      %v921 = vpop.permute.xlu0 %920
      %vm922 = vcmask 818176
      %v923 = vsel %vm922, %v919, %v921
      %925 = vst.msk [vmem:[%s197 + $0x8] sm:$0xff] %vm881, %v923
      %926 = vrot.lane.b32.xlu0 %v849, 98
      %v927 = vpop.permute.xlu0 %926
      %929 = vst.msk [vmem:[%s197 + $0x8] sm:$0xff] %vm891, %v927
      %p930 = scmp.lt.s32.totalorder %s15, 1
      %s931 = scalar_select %p930, %s15, 1
      %s932 = smul.addr %s931, 2
      %s933 = smul.addr %s932, 8
      %s934 = scalar_lea.vmem %s4, %s933
      // Predicated region
      $region37: #{conv_forward.3} parent=35 // pred_check
        %p935 = pneg %p122
      $region38: #{conv_forward.3} parent=35 // pred_check_branch
        %937 = sbr.rel (%p935) target = $region40
      $region39: #{conv_forward.3} parent=35 // pred_region
        _
      $region40: #{conv_forward.3} parent=35 // pred_fallthru
        _
    $region36: #{conv_forward.3} parent=5 // pred_fallthru
      _
    %p938 = scmp.le.s32.totalorder 2, %s10
    // Predicated region
    $region41: #{conv_forward.3} parent=5 // pred_check
      %p939 = pneg %p938
    $region42: #{conv_forward.3} parent=5 // pred_check_branch
      %941 = sbr.rel (%p939) target = $region44
    $region43: #{conv_forward.3} parent=5 // pred_region
      %s942 = ssub.s32 %s10, 2
      // Predicated region
      $region45: #{conv_forward.3} parent=43 // pred_check
        %p943 = pneg %p128
      $region46: #{conv_forward.3} parent=43 // pred_check_branch
        %945 = sbr.rel (%p943) target = $region48
      $region47: #{conv_forward.3} parent=43 // pred_region
        %p946 = scmp.lt.s32.totalorder %s16, 1
        %s947 = scalar_select %p946, %s16, 1
        %s948 = smul.addr %s947, 2
        %s949 = smul.addr %s948, 8
        %s950 = scalar_lea.vmem %s4, %s949
      $region48: #{conv_forward.3} parent=43 // pred_fallthru
        _
    $region44: #{conv_forward.3} parent=5 // pred_fallthru
      _
  $region6: #{conv_forward.3} parent=0 // loop_footer
    %s14 = sadd.s32 1, %s10
  $region7: #{conv_forward.3} parent=0 // loop_footer_branch
    %9 = sbr.rel target = $region3
  $region8: #{conv_forward.3} parent=0 // loop_exit
    _

// kernel: conv_forward.2
$region0: #{conv_forward.2}
  #allocation0 [shape = 'u32[]', space=smem, size = 0x4, offset = 0x4, fixed_abs, tag = 'smem constant byte address 0x4 - core index']
  #allocation1 [shape = 'u32[72,128]{1,0:T(1,128)}', space=vmem, size = 0x9000, scoped, tag = 'internal scratch']
  %s0 = inlined_call_operand.vmem [shape: bf16[2,4,324], index: 0, kind: input, shape index: {}]
  %s1 = inlined_call_operand.vmem [shape: bf16[9,8,4], index: 1, kind: input, shape index: {}]
  %s2 = inlined_call_operand.vmem [shape: f32[8,1], index: 2, kind: input, shape index: {}]
  %s3 = inlined_call_operand.vmem [shape: f32[1,286], index: 3, kind: input, shape index: {}]
  %s4 = inlined_call_operand.vmem [shape: f32[2,8,2], index: 4, kind: output, shape index: {}]
  %s5 = sld [smem:[#allocation0]]
  $region49: #{conv_forward.2} parent=0
    _
  %s7 = ssub.s32 1, %s5
  %s8 = scalar_select 0, %s7, %s5
  loop: start=0, step=1, limit=4
  $region2: #{conv_forward.2} parent=0 // loop_pre_header
    _
  $region3: #{conv_forward.2} parent=0 // loop_header
    %s10 = sphi 0, %s14
    %p11 = scmp.ge.s32.totalorder %s10, 4
    %s20 = sphi 0, %s22
    %s23 = sphi 0, %s20
    %s24 = sphi 0, %s23
    %s40 = sphi 0, %s24
    %s44 = sphi 0, %s44
    %s46 = sphi 0, %s44
    %s47 = sphi 0, %s46
    %s61 = sphi 0, %s47
    %s65 = sphi 0, %s65
    %s67 = sphi 0, %s65
    %s68 = sphi 0, %s67
    %s82 = sphi 0, %s68
    %s86 = sphi 0, %s86
    %s88 = sphi 0, %s86
    %s89 = sphi 0, %s88
    %s103 = sphi 0, %s89
    %s109 = sphi 0, %s111
    %s112 = sphi 0, %s109
    %s113 = sphi 0, %s112
    %s129 = sphi 0, %s113
  $region4: #{conv_forward.2} parent=0 // loop_header_branch
    %13 = sbr.rel (%p11) target = $region8
  $region5: #{conv_forward.2} parent=0 // loop_body
    %s15 = ssub.s32 %s10, 1
    %s16 = ssub.s32 %s10, 2
    %s17 = sadd.s32 %s10, 1
    %s18 = ssub.s32 %s10, %s17
    %p19 = scmp.eq.s32.totalorder %s18, 0
    %s21 = sadd.s32 %s20, 1
    %s22 = scalar_select %p19, %s20, %s21
    %p25 = pneg %p19
    %p26 = scmp.eq.s32.totalorder %s10, 1
    %p27 = por %p25, %p26
    %p28 = scmp.ne.s32.totalorder %s20, %s23
    %p29 = scmp.eq.s32.totalorder %s10, 0
    %p30 = por %p28, %p29
    %p31 = scmp.ne.s32.totalorder %s20, %s23
    %p32 = scmp.eq.s32.totalorder %s15, 1
    %p33 = por %p31, %p32
    %p34 = scmp.ne.s32.totalorder %s23, %s24
    %p35 = scmp.eq.s32.totalorder %s15, 0
    %p36 = por %p34, %p35
    %p37 = scmp.ne.s32.totalorder %s23, %s24
    %p38 = scmp.eq.s32.totalorder %s16, 1
    %p39 = por %p37, %p38
    %p41 = scmp.ne.s32.totalorder %s24, %s40
    %p42 = scmp.eq.s32.totalorder %s16, 0
    %p43 = por %p41, %p42
    %s45 = sadd.s32 %s44, 1
    %p48 = scmp.eq.s32.totalorder %s10, 1
    %p49 = scmp.ne.s32.totalorder %s44, %s46
    %p50 = scmp.eq.s32.totalorder %s10, 0
    %p51 = por %p49, %p50
    %p52 = scmp.ne.s32.totalorder %s44, %s46
    %p53 = scmp.eq.s32.totalorder %s15, 1
    %p54 = por %p52, %p53
    %p55 = scmp.ne.s32.totalorder %s46, %s47
    %p56 = scmp.eq.s32.totalorder %s15, 0
    %p57 = por %p55, %p56
    %p58 = scmp.ne.s32.totalorder %s46, %s47
    %p59 = scmp.eq.s32.totalorder %s16, 1
    %p60 = por %p58, %p59
    %p62 = scmp.ne.s32.totalorder %s47, %s61
    %p63 = scmp.eq.s32.totalorder %s16, 0
    %p64 = por %p62, %p63
    %s66 = sadd.s32 %s65, 1
    %p69 = scmp.eq.s32.totalorder %s10, 1
    %p70 = scmp.ne.s32.totalorder %s65, %s67
    %p71 = scmp.eq.s32.totalorder %s10, 0
    %p72 = por %p70, %p71
    %p73 = scmp.ne.s32.totalorder %s65, %s67
    %p74 = scmp.eq.s32.totalorder %s15, 1
    %p75 = por %p73, %p74
    %p76 = scmp.ne.s32.totalorder %s67, %s68
    %p77 = scmp.eq.s32.totalorder %s15, 0
    %p78 = por %p76, %p77
    %p79 = scmp.ne.s32.totalorder %s67, %s68
    %p80 = scmp.eq.s32.totalorder %s16, 1
    %p81 = por %p79, %p80
    %p83 = scmp.ne.s32.totalorder %s68, %s82
    %p84 = scmp.eq.s32.totalorder %s16, 0
    %p85 = por %p83, %p84
    %s87 = sadd.s32 %s86, 1
    %p90 = scmp.eq.s32.totalorder %s10, 1
    %p91 = scmp.ne.s32.totalorder %s86, %s88
    %p92 = scmp.eq.s32.totalorder %s10, 0
    %p93 = por %p91, %p92
    %p94 = scmp.ne.s32.totalorder %s86, %s88
    %p95 = scmp.eq.s32.totalorder %s15, 1
    %p96 = por %p94, %p95
    %p97 = scmp.ne.s32.totalorder %s88, %s89
    %p98 = scmp.eq.s32.totalorder %s15, 0
    %p99 = por %p97, %p98
    %p100 = scmp.ne.s32.totalorder %s88, %s89
    %p101 = scmp.eq.s32.totalorder %s16, 1
    %p102 = por %p100, %p101
    %p104 = scmp.ne.s32.totalorder %s89, %s103
    %p105 = scmp.eq.s32.totalorder %s16, 0
    %p106 = por %p104, %p105
    %s107 = ssub.s32 %s10, %s17
    %p108 = scmp.eq.s32.totalorder %s107, 0
    %s110 = sadd.s32 %s109, 1
    %s111 = scalar_select %p108, %s109, %s110
    %p114 = pneg %p108
    %p115 = scmp.eq.s32.totalorder %s10, 1
    %p116 = por %p114, %p115
    %p117 = scmp.ne.s32.totalorder %s109, %s112
    %p118 = scmp.eq.s32.totalorder %s10, 0
    %p119 = por %p117, %p118
    %p120 = scmp.ne.s32.totalorder %s109, %s112
    %p121 = scmp.eq.s32.totalorder %s15, 1
    %p122 = por %p120, %p121
    %p123 = scmp.ne.s32.totalorder %s112, %s113
    %p124 = scmp.eq.s32.totalorder %s15, 0
    %p125 = por %p123, %p124
    %p126 = scmp.ne.s32.totalorder %s112, %s113
    %p127 = scmp.eq.s32.totalorder %s16, 1
    %p128 = por %p126, %p127
    %p130 = scmp.ne.s32.totalorder %s113, %s129
    %p131 = scmp.eq.s32.totalorder %s16, 0
    %p132 = por %p130, %p131
    %p133 = scmp.le.s32.totalorder 1, %s10
    %p134 = scmp.lt.s32.totalorder %s10, 3
    %p135 = pnand %p133, %p134
    %p136 = pneg %p135
    // Predicated region
    $region9: #{conv_forward.2} parent=5 // pred_check
      _
    $region10: #{conv_forward.2} parent=5 // pred_check_branch
      %138 = sbr.rel (%p135) target = $region12
    $region11: #{conv_forward.2} parent=5 // pred_region
      %s139 = ssub.s32 %s10, 1
      // Predicated region
      $region13: #{conv_forward.2} parent=11 // pred_check
        %p140 = pneg %p57
      $region14: #{conv_forward.2} parent=11 // pred_check_branch
        %142 = sbr.rel (%p140) target = $region16
      $region15: #{conv_forward.2} parent=11 // pred_region
        _
      $region16: #{conv_forward.2} parent=11 // pred_fallthru
        _
      // Predicated region
      $region17: #{conv_forward.2} parent=11 // pred_check
        %p143 = pneg %p78
      $region18: #{conv_forward.2} parent=11 // pred_check_branch
        %145 = sbr.rel (%p143) target = $region20
      $region19: #{conv_forward.2} parent=11 // pred_region
        _
      $region20: #{conv_forward.2} parent=11 // pred_fallthru
        _
      // Predicated region
      $region21: #{conv_forward.2} parent=11 // pred_check
        %p146 = pneg %p99
      $region22: #{conv_forward.2} parent=11 // pred_check_branch
        %148 = sbr.rel (%p146) target = $region24
      $region23: #{conv_forward.2} parent=11 // pred_region
        _
      $region24: #{conv_forward.2} parent=11 // pred_fallthru
        _
    $region12: #{conv_forward.2} parent=5 // pred_fallthru
      _
    %p149 = scmp.lt.s32.totalorder %s10, 2
    // Predicated region
    $region25: #{conv_forward.2} parent=5 // pred_check
      %p150 = pneg %p149
    $region26: #{conv_forward.2} parent=5 // pred_check_branch
      %152 = sbr.rel (%p150) target = $region28
    $region27: #{conv_forward.2} parent=5 // pred_region
      // Predicated region
      $region29: #{conv_forward.2} parent=27 // pred_check
        %p153 = pneg %p30
      $region30: #{conv_forward.2} parent=27 // pred_check_branch
        %155 = sbr.rel (%p153) target = $region32
      $region31: #{conv_forward.2} parent=27 // pred_region
        %p156 = scmp.lt.s32.totalorder %s10, 1
        %s157 = scalar_select %p156, %s10, 1
        %s158 = smul.addr %s157, 3
        %s159 = smul.addr %s158, 2
        %s160 = scalar_lea.vmem %s0, %s159
      $region32: #{conv_forward.2} parent=27 // pred_fallthru
        _
    $region28: #{conv_forward.2} parent=5 // pred_fallthru
      _
    %p161 = scmp.le.s32.totalorder 1, %s10
    %p162 = scmp.lt.s32.totalorder %s10, 3
    %p163 = pnand %p161, %p162
    %p164 = pneg %p163
    // Predicated region
    $region33: #{conv_forward.2} parent=5 // pred_check
      _
    $region34: #{conv_forward.2} parent=5 // pred_check_branch
      %166 = sbr.rel (%p163) target = $region36
    $region35: #{conv_forward.2} parent=5 // pred_region
      %s167 = ssub.s32 %s10, 1
      %p168 = scmp.lt.s32.totalorder %s15, 1
      %s169 = scalar_select %p168, %s15, 1
      %s170 = smul.addr %s169, 3
      %s171 = smul.addr %s170, 2
      %s172 = scalar_lea.vmem %s0, %s171
      %p173 = pneg %p36
      %p174 = pneg %p33
      %p175 = pneg %p57
      %p176 = pneg %p54
      %p177 = pneg %p78
      %p178 = pneg %p75
      %p179 = pneg %p99
      %p180 = pneg %p96
      %p181 = pneg %p125
      %p182 = pneg %p122
      %p183 = scmp.lt.s32.totalorder %s15, 1
      %s184 = scalar_select %p183, %s15, 1
      %s185 = smul.addr %s184, 8
      %s186 = scalar_lea.vmem %s4, %s185
      %p187 = scmp.lt.s32.totalorder %s15, 1
      %s188 = scalar_select %p187, %s15, 1
      %s189 = smul.addr %s188, 3
      %s190 = smul.addr %s189, 2
      %s191 = scalar_lea.vmem %s0, %s190
      %p192 = scmp.lt.s32.totalorder %s15, 1
      %s193 = scalar_select %p192, %s15, 1
      %s194 = smul.addr %s193, 8
      %s195 = scalar_lea.vmem %s4, %s194
      %v197 = vld [vmem:[%s191] sm:$0x3f]
      %v198 = vld [vmem:[%s1] sm:$0xf]
      %s199 = scalar_lea.vmem %s1, 4
      %v200 = vld [vmem:[%s199] sm:$0xf]
      %202 = vst [vmem:[#allocation1] ss:$4 sm:$0xff] %v197
      %v203 = vld.sshfl [vmem:[#allocation1] sm:$0xff pattern:$0x73625140]
      %v205 = vld.sshfl [vmem:[#allocation1 + $0x8] sm:$0xff pattern:$0x73625140]
      %v207 = vld.sshfl [vmem:[#allocation1 + $0x10] sm:$0xff pattern:$0x73625140]
      %209 = vrot.lane.b32.xlu0 %v203, 127
      %v210 = vpop.permute.xlu0 %209
      %211 = vrot.lane.b32.xlu0 %v205, 127
      %v212 = vpop.permute.xlu0 %211
      %213 = vrot.lane.b32.xlu0 %v207, 127
      %v214 = vpop.permute.xlu0 %213
      %vm215 = vcmask 1039360
      %v216 = vsel %vm215, %v210, %v212
      %v217 = vsel %vm215, %v212, %v214
      %vm218 = vcmask 31744
      %v220 = vsel %vm218, %v200, 0
      %vm222 = vcmask 1041408
      %v224 = vsel %vm222, %v216, 0
      %v227 = vsel %vm222, %v217, 0
      %v230 = vsel %vm222, %v214, 0
      %232 = vmatpush.bf16.msra.mxu0 0
      %233 = vmatpush.bf16.msra.mxu0 0
      %234 = vmatpush.bf16.msra.mxu0 0
      %235 = vmatpush.bf16.msra.mxu0 0
      %236 = vmatpush.bf16.msra.mxu0 0
      %237 = vmatpush.bf16.msra.mxu0 0
      %238 = vmatpush.bf16.msra.mxu0 0
      %239 = vmatpush.bf16.msra.mxu0 %v224
      %240 = vmatmul.bf16.gmra.mxu0 %v220
      %v241 = vpop.f32.mrf.mxu0
      %v242 = vadd.f32 0.0, %v241
      %v243 = vpop.f32.mrf.mxu0
      %244 = vdwg.mxu0
      %245 = vmatpush.bf16.msra.mxu0 0
      %246 = vmatpush.bf16.msra.mxu0 0
      %247 = vmatpush.bf16.msra.mxu0 0
      %248 = vmatpush.bf16.msra.mxu0 0
      %249 = vmatpush.bf16.msra.mxu0 0
      %250 = vmatpush.bf16.msra.mxu0 0
      %251 = vmatpush.bf16.msra.mxu0 0
      %252 = vmatpush.bf16.msra.mxu0 %v227
      %253 = vmatmul.bf16.gmra.mxu0 %v220
      %v254 = vpop.f32.mrf.mxu0
      %v255 = vadd.f32 0.0, %v254
      %v256 = vpop.f32.mrf.mxu0
      %257 = vdwg.mxu0
      %258 = vmatpush.bf16.msra.mxu0 0
      %259 = vmatpush.bf16.msra.mxu0 0
      %260 = vmatpush.bf16.msra.mxu0 0
      %261 = vmatpush.bf16.msra.mxu0 0
      %262 = vmatpush.bf16.msra.mxu0 0
      %263 = vmatpush.bf16.msra.mxu0 0
      %264 = vmatpush.bf16.msra.mxu0 0
      %265 = vmatpush.bf16.msra.mxu0 %v230
      %266 = vmatmul.bf16.gmra.mxu0 %v220
      %v267 = vpop.f32.mrf.mxu0
      %v268 = vadd.f32 0.0, %v267
      %v269 = vpop.f32.mrf.mxu0
      %270 = vdwg.mxu0
      %271 = vst [vmem:[#allocation1] ss:$4 sm:$0xff] %v197
      %v272 = vld.sshfl [vmem:[#allocation1] sm:$0xff pattern:$0x73625140]
      %v273 = vld.sshfl [vmem:[#allocation1 + $0x8] sm:$0xff pattern:$0x73625140]
      %v274 = vld.sshfl [vmem:[#allocation1 + $0x10] sm:$0xff pattern:$0x73625140]
      %v276 = vsel %vm218, %v198, 0
      %v278 = vsel %vm222, %v272, 0
      %v280 = vsel %vm222, %v273, 0
      %v282 = vsel %vm222, %v274, 0
      %284 = vmatpush.bf16.msra.mxu0 0
      %285 = vmatpush.bf16.msra.mxu0 0
      %286 = vmatpush.bf16.msra.mxu0 0
      %287 = vmatpush.bf16.msra.mxu0 0
      %288 = vmatpush.bf16.msra.mxu0 0
      %289 = vmatpush.bf16.msra.mxu0 0
      %290 = vmatpush.bf16.msra.mxu0 0
      %291 = vmatpush.bf16.msra.mxu0 %v278
      %292 = vmatmul.bf16.gmra.mxu0 %v276
      %v293 = vpop.f32.mrf.mxu0
      %v294 = vadd.f32 %v242, %v293
      %v295 = vpop.f32.mrf.mxu0
      %296 = vdwg.mxu0
      %297 = vmatpush.bf16.msra.mxu0 0
      %298 = vmatpush.bf16.msra.mxu0 0
      %299 = vmatpush.bf16.msra.mxu0 0
      %300 = vmatpush.bf16.msra.mxu0 0
      %301 = vmatpush.bf16.msra.mxu0 0
      %302 = vmatpush.bf16.msra.mxu0 0
      %303 = vmatpush.bf16.msra.mxu0 0
      %304 = vmatpush.bf16.msra.mxu0 %v280
      %305 = vmatmul.bf16.gmra.mxu0 %v276
      %v306 = vpop.f32.mrf.mxu0
      %v307 = vadd.f32 %v255, %v306
      %v308 = vpop.f32.mrf.mxu0
      %309 = vdwg.mxu0
      %310 = vmatpush.bf16.msra.mxu0 0
      %311 = vmatpush.bf16.msra.mxu0 0
      %312 = vmatpush.bf16.msra.mxu0 0
      %313 = vmatpush.bf16.msra.mxu0 0
      %314 = vmatpush.bf16.msra.mxu0 0
      %315 = vmatpush.bf16.msra.mxu0 0
      %316 = vmatpush.bf16.msra.mxu0 0
      %317 = vmatpush.bf16.msra.mxu0 %v282
      %318 = vmatmul.bf16.gmra.mxu0 %v276
      %v319 = vpop.f32.mrf.mxu0
      %v320 = vadd.f32 %v268, %v319
      %v321 = vpop.f32.mrf.mxu0
      %322 = vdwg.mxu0
      %s323 = scalar_lea.vmem %s1, 8
      %v324 = vld [vmem:[%s323] sm:$0xf]
      %325 = vst [vmem:[#allocation1] ss:$4 sm:$0xff] %v197
      %v326 = vld.sshfl [vmem:[#allocation1] sm:$0xff pattern:$0x73625140]
      %v328 = vld.sshfl [vmem:[#allocation1 + $0x8] sm:$0xff pattern:$0x73625140]
      %v330 = vld.sshfl [vmem:[#allocation1 + $0x10] sm:$0xff pattern:$0x73625140]
      %332 = vrot.lane.b32.xlu0 %v326, 126
      %v333 = vpop.permute.xlu0 %332
      %334 = vrot.lane.b32.xlu0 %v328, 126
      %v335 = vpop.permute.xlu0 %334
      %336 = vrot.lane.b32.xlu0 %v330, 126
      %v337 = vpop.permute.xlu0 %336
      %vm338 = vcmask 1031168
      %v339 = vsel %vm338, %v333, %v335
      %v340 = vsel %vm338, %v335, %v337
      %v342 = vsel %vm218, %v324, 0
      %v345 = vsel %vm222, %v339, 0
      %v348 = vsel %vm222, %v340, 0
      %v351 = vsel %vm222, %v337, 0
      %353 = vmatpush.bf16.msra.mxu0 0
      %354 = vmatpush.bf16.msra.mxu0 0
      %355 = vmatpush.bf16.msra.mxu0 0
      %356 = vmatpush.bf16.msra.mxu0 0
      %357 = vmatpush.bf16.msra.mxu0 0
      %358 = vmatpush.bf16.msra.mxu0 0
      %359 = vmatpush.bf16.msra.mxu0 0
      %360 = vmatpush.bf16.msra.mxu0 %v345
      %361 = vmatmul.bf16.gmra.mxu0 %v342
      %v362 = vpop.f32.mrf.mxu0
      %v363 = vadd.f32 0.0, %v362
      %v364 = vpop.f32.mrf.mxu0
      %365 = vdwg.mxu0
      %366 = vmatpush.bf16.msra.mxu0 0
      %367 = vmatpush.bf16.msra.mxu0 0
      %368 = vmatpush.bf16.msra.mxu0 0
      %369 = vmatpush.bf16.msra.mxu0 0
      %370 = vmatpush.bf16.msra.mxu0 0
      %371 = vmatpush.bf16.msra.mxu0 0
      %372 = vmatpush.bf16.msra.mxu0 0
      %373 = vmatpush.bf16.msra.mxu0 %v348
      %374 = vmatmul.bf16.gmra.mxu0 %v342
      %v375 = vpop.f32.mrf.mxu0
      %v376 = vadd.f32 0.0, %v375
      %v377 = vpop.f32.mrf.mxu0
      %378 = vdwg.mxu0
      %379 = vmatpush.bf16.msra.mxu0 0
      %380 = vmatpush.bf16.msra.mxu0 0
      %381 = vmatpush.bf16.msra.mxu0 0
      %382 = vmatpush.bf16.msra.mxu0 0
      %383 = vmatpush.bf16.msra.mxu0 0
      %384 = vmatpush.bf16.msra.mxu0 0
      %385 = vmatpush.bf16.msra.mxu0 0
      %386 = vmatpush.bf16.msra.mxu0 %v351
      %387 = vmatmul.bf16.gmra.mxu0 %v342
      %v388 = vpop.f32.mrf.mxu0
      %v389 = vadd.f32 0.0, %v388
      %v390 = vpop.f32.mrf.mxu0
      %391 = vdwg.mxu0
      %v392 = vadd.f32 %v294, %v363
      %v393 = vadd.f32 %v307, %v376
      %v394 = vadd.f32 %v320, %v389
      %s395 = scalar_lea.vmem %s1, 12
      %v396 = vld [vmem:[%s395] sm:$0xf]
      %397 = vst [vmem:[#allocation1] ss:$4 sm:$0xff] %v197
      %v398 = vld.sshfl [vmem:[#allocation1] sm:$0xff pattern:$0x73625140]
      %v400 = vld.sshfl [vmem:[#allocation1 + $0x8] sm:$0xff pattern:$0x73625140]
      %v402 = vld.sshfl [vmem:[#allocation1 + $0x10] sm:$0xff pattern:$0x73625140]
      %404 = vrot.lane.b32.xlu0 %v398, 110
      %v405 = vpop.permute.xlu0 %404
      %406 = vrot.lane.b32.xlu0 %v400, 110
      %v407 = vpop.permute.xlu0 %406
      %408 = vrot.lane.b32.xlu0 %v402, 110
      %v409 = vpop.permute.xlu0 %408
      %vm410 = vcmask 900096
      %v411 = vsel %vm410, %v405, %v407
      %v412 = vsel %vm410, %v407, %v409
      %v414 = vsel %vm218, %v396, 0
      %v417 = vsel %vm222, %v411, 0
      %v420 = vsel %vm222, %v412, 0
      %v423 = vsel %vm222, %v409, 0
      %425 = vmatpush.bf16.msra.mxu0 0
      %426 = vmatpush.bf16.msra.mxu0 0
      %427 = vmatpush.bf16.msra.mxu0 0
      %428 = vmatpush.bf16.msra.mxu0 0
      %429 = vmatpush.bf16.msra.mxu0 0
      %430 = vmatpush.bf16.msra.mxu0 0
      %431 = vmatpush.bf16.msra.mxu0 0
      %432 = vmatpush.bf16.msra.mxu0 %v417
      %433 = vmatmul.bf16.gmra.mxu0 %v414
      %v434 = vpop.f32.mrf.mxu0
      %v435 = vadd.f32 0.0, %v434
      %v436 = vpop.f32.mrf.mxu0
      %437 = vdwg.mxu0
      %438 = vmatpush.bf16.msra.mxu0 0
      %439 = vmatpush.bf16.msra.mxu0 0
      %440 = vmatpush.bf16.msra.mxu0 0
      %441 = vmatpush.bf16.msra.mxu0 0
      %442 = vmatpush.bf16.msra.mxu0 0
      %443 = vmatpush.bf16.msra.mxu0 0
      %444 = vmatpush.bf16.msra.mxu0 0
      %445 = vmatpush.bf16.msra.mxu0 %v420
      %446 = vmatmul.bf16.gmra.mxu0 %v414
      %v447 = vpop.f32.mrf.mxu0
      %v448 = vadd.f32 0.0, %v447
      %v449 = vpop.f32.mrf.mxu0
      %450 = vdwg.mxu0
      %451 = vmatpush.bf16.msra.mxu0 0
      %452 = vmatpush.bf16.msra.mxu0 0
      %453 = vmatpush.bf16.msra.mxu0 0
      %454 = vmatpush.bf16.msra.mxu0 0
      %455 = vmatpush.bf16.msra.mxu0 0
      %456 = vmatpush.bf16.msra.mxu0 0
      %457 = vmatpush.bf16.msra.mxu0 0
      %458 = vmatpush.bf16.msra.mxu0 %v423
      %459 = vmatmul.bf16.gmra.mxu0 %v414
      %v460 = vpop.f32.mrf.mxu0
      %v461 = vadd.f32 0.0, %v460
      %v462 = vpop.f32.mrf.mxu0
      %463 = vdwg.mxu0
      %v464 = vadd.f32 %v392, %v435
      %v465 = vadd.f32 %v393, %v448
      %v466 = vadd.f32 %v394, %v461
      %s467 = scalar_lea.vmem %s1, 16
      %v468 = vld [vmem:[%s467] sm:$0xf]
      %469 = vst [vmem:[#allocation1] ss:$4 sm:$0xff] %v197
      %v470 = vld.sshfl [vmem:[#allocation1] sm:$0xff pattern:$0x73625140]
      %v472 = vld.sshfl [vmem:[#allocation1 + $0x8] sm:$0xff pattern:$0x73625140]
      %v474 = vld.sshfl [vmem:[#allocation1 + $0x10] sm:$0xff pattern:$0x73625140]
      %476 = vrot.lane.b32.xlu0 %v470, 109
      %v477 = vpop.permute.xlu0 %476
      %478 = vrot.lane.b32.xlu0 %v472, 109
      %v479 = vpop.permute.xlu0 %478
      %480 = vrot.lane.b32.xlu0 %v474, 109
      %v481 = vpop.permute.xlu0 %480
      %vm482 = vcmask 891904
      %v483 = vsel %vm482, %v477, %v479
      %v484 = vsel %vm482, %v479, %v481
      %v486 = vsel %vm218, %v468, 0
      %v489 = vsel %vm222, %v483, 0
      %v492 = vsel %vm222, %v484, 0
      %v495 = vsel %vm222, %v481, 0
      %497 = vmatpush.bf16.msra.mxu0 0
      %498 = vmatpush.bf16.msra.mxu0 0
      %499 = vmatpush.bf16.msra.mxu0 0
      %500 = vmatpush.bf16.msra.mxu0 0
      %501 = vmatpush.bf16.msra.mxu0 0
      %502 = vmatpush.bf16.msra.mxu0 0
      %503 = vmatpush.bf16.msra.mxu0 0
      %504 = vmatpush.bf16.msra.mxu0 %v489
      %505 = vmatmul.bf16.gmra.mxu0 %v486
      %v506 = vpop.f32.mrf.mxu0
      %v507 = vadd.f32 0.0, %v506
      %v508 = vpop.f32.mrf.mxu0
      %509 = vdwg.mxu0
      %510 = vmatpush.bf16.msra.mxu0 0
      %511 = vmatpush.bf16.msra.mxu0 0
      %512 = vmatpush.bf16.msra.mxu0 0
      %513 = vmatpush.bf16.msra.mxu0 0
      %514 = vmatpush.bf16.msra.mxu0 0
      %515 = vmatpush.bf16.msra.mxu0 0
      %516 = vmatpush.bf16.msra.mxu0 0
      %517 = vmatpush.bf16.msra.mxu0 %v492
      %518 = vmatmul.bf16.gmra.mxu0 %v486
      %v519 = vpop.f32.mrf.mxu0
      %v520 = vadd.f32 0.0, %v519
      %v521 = vpop.f32.mrf.mxu0
      %522 = vdwg.mxu0
      %523 = vmatpush.bf16.msra.mxu0 0
      %524 = vmatpush.bf16.msra.mxu0 0
      %525 = vmatpush.bf16.msra.mxu0 0
      %526 = vmatpush.bf16.msra.mxu0 0
      %527 = vmatpush.bf16.msra.mxu0 0
      %528 = vmatpush.bf16.msra.mxu0 0
      %529 = vmatpush.bf16.msra.mxu0 0
      %530 = vmatpush.bf16.msra.mxu0 %v495
      %531 = vmatmul.bf16.gmra.mxu0 %v486
      %v532 = vpop.f32.mrf.mxu0
      %v533 = vadd.f32 0.0, %v532
      %v534 = vpop.f32.mrf.mxu0
      %535 = vdwg.mxu0
      %v536 = vadd.f32 %v464, %v507
      %v537 = vadd.f32 %v465, %v520
      %v538 = vadd.f32 %v466, %v533
      %s539 = scalar_lea.vmem %s1, 20
      %v540 = vld [vmem:[%s539] sm:$0xf]
      %541 = vst [vmem:[#allocation1] ss:$4 sm:$0xff] %v197
      %v542 = vld.sshfl [vmem:[#allocation1] sm:$0xff pattern:$0x73625140]
      %v544 = vld.sshfl [vmem:[#allocation1 + $0x8] sm:$0xff pattern:$0x73625140]
      %v546 = vld.sshfl [vmem:[#allocation1 + $0x10] sm:$0xff pattern:$0x73625140]
      %548 = vrot.lane.b32.xlu0 %v542, 108
      %v549 = vpop.permute.xlu0 %548
      %550 = vrot.lane.b32.xlu0 %v544, 108
      %v551 = vpop.permute.xlu0 %550
      %552 = vrot.lane.b32.xlu0 %v546, 108
      %v553 = vpop.permute.xlu0 %552
      %vm554 = vcmask 883712
      %v555 = vsel %vm554, %v549, %v551
      %v556 = vsel %vm554, %v551, %v553
      %v558 = vsel %vm218, %v540, 0
      %v561 = vsel %vm222, %v555, 0
      %v564 = vsel %vm222, %v556, 0
      %v567 = vsel %vm222, %v553, 0
      %569 = vmatpush.bf16.msra.mxu0 0
      %570 = vmatpush.bf16.msra.mxu0 0
      %571 = vmatpush.bf16.msra.mxu0 0
      %572 = vmatpush.bf16.msra.mxu0 0
      %573 = vmatpush.bf16.msra.mxu0 0
      %574 = vmatpush.bf16.msra.mxu0 0
      %575 = vmatpush.bf16.msra.mxu0 0
      %576 = vmatpush.bf16.msra.mxu0 %v561
      %577 = vmatmul.bf16.gmra.mxu0 %v558
      %v578 = vpop.f32.mrf.mxu0
      %v579 = vadd.f32 0.0, %v578
      %v580 = vpop.f32.mrf.mxu0
      %581 = vdwg.mxu0
      %582 = vmatpush.bf16.msra.mxu0 0
      %583 = vmatpush.bf16.msra.mxu0 0
      %584 = vmatpush.bf16.msra.mxu0 0
      %585 = vmatpush.bf16.msra.mxu0 0
      %586 = vmatpush.bf16.msra.mxu0 0
      %587 = vmatpush.bf16.msra.mxu0 0
      %588 = vmatpush.bf16.msra.mxu0 0
      %589 = vmatpush.bf16.msra.mxu0 %v564
      %590 = vmatmul.bf16.gmra.mxu0 %v558
      %v591 = vpop.f32.mrf.mxu0
      %v592 = vadd.f32 0.0, %v591
      %v593 = vpop.f32.mrf.mxu0
      %594 = vdwg.mxu0
      %595 = vmatpush.bf16.msra.mxu0 0
      %596 = vmatpush.bf16.msra.mxu0 0
      %597 = vmatpush.bf16.msra.mxu0 0
      %598 = vmatpush.bf16.msra.mxu0 0
      %599 = vmatpush.bf16.msra.mxu0 0
      %600 = vmatpush.bf16.msra.mxu0 0
      %601 = vmatpush.bf16.msra.mxu0 0
      %602 = vmatpush.bf16.msra.mxu0 %v567
      %603 = vmatmul.bf16.gmra.mxu0 %v558
      %v604 = vpop.f32.mrf.mxu0
      %v605 = vadd.f32 0.0, %v604
      %v606 = vpop.f32.mrf.mxu0
      %607 = vdwg.mxu0
      %v608 = vadd.f32 %v536, %v579
      %v609 = vadd.f32 %v537, %v592
      %v610 = vadd.f32 %v538, %v605
      %s611 = scalar_lea.vmem %s1, 24
      %v612 = vld [vmem:[%s611] sm:$0xf]
      %613 = vst [vmem:[#allocation1] ss:$4 sm:$0xff] %v197
      %v614 = vld.sshfl [vmem:[#allocation1] sm:$0xff pattern:$0x73625140]
      %v616 = vld.sshfl [vmem:[#allocation1 + $0x8] sm:$0xff pattern:$0x73625140]
      %v618 = vld.sshfl [vmem:[#allocation1 + $0x10] sm:$0xff pattern:$0x73625140]
      %620 = vrot.lane.b32.xlu0 %v614, 92
      %v621 = vpop.permute.xlu0 %620
      %622 = vrot.lane.b32.xlu0 %v616, 92
      %v623 = vpop.permute.xlu0 %622
      %624 = vrot.lane.b32.xlu0 %v618, 92
      %v625 = vpop.permute.xlu0 %624
      %vm626 = vcmask 752640
      %v627 = vsel %vm626, %v621, %v623
      %v628 = vsel %vm626, %v623, %v625
      %v630 = vsel %vm218, %v612, 0
      %v633 = vsel %vm222, %v627, 0
      %v636 = vsel %vm222, %v628, 0
      %v639 = vsel %vm222, %v625, 0
      %641 = vmatpush.bf16.msra.mxu0 0
      %642 = vmatpush.bf16.msra.mxu0 0
      %643 = vmatpush.bf16.msra.mxu0 0
      %644 = vmatpush.bf16.msra.mxu0 0
      %645 = vmatpush.bf16.msra.mxu0 0
      %646 = vmatpush.bf16.msra.mxu0 0
      %647 = vmatpush.bf16.msra.mxu0 0
      %648 = vmatpush.bf16.msra.mxu0 %v633
      %649 = vmatmul.bf16.gmra.mxu0 %v630
      %v650 = vpop.f32.mrf.mxu0
      %v651 = vadd.f32 0.0, %v650
      %v652 = vpop.f32.mrf.mxu0
      %653 = vdwg.mxu0
      %654 = vmatpush.bf16.msra.mxu0 0
      %655 = vmatpush.bf16.msra.mxu0 0
      %656 = vmatpush.bf16.msra.mxu0 0
      %657 = vmatpush.bf16.msra.mxu0 0
      %658 = vmatpush.bf16.msra.mxu0 0
      %659 = vmatpush.bf16.msra.mxu0 0
      %660 = vmatpush.bf16.msra.mxu0 0
      %661 = vmatpush.bf16.msra.mxu0 %v636
      %662 = vmatmul.bf16.gmra.mxu0 %v630
      %v663 = vpop.f32.mrf.mxu0
      %v664 = vadd.f32 0.0, %v663
      %v665 = vpop.f32.mrf.mxu0
      %666 = vdwg.mxu0
      %667 = vmatpush.bf16.msra.mxu0 0
      %668 = vmatpush.bf16.msra.mxu0 0
      %669 = vmatpush.bf16.msra.mxu0 0
      %670 = vmatpush.bf16.msra.mxu0 0
      %671 = vmatpush.bf16.msra.mxu0 0
      %672 = vmatpush.bf16.msra.mxu0 0
      %673 = vmatpush.bf16.msra.mxu0 0
      %674 = vmatpush.bf16.msra.mxu0 %v639
      %675 = vmatmul.bf16.gmra.mxu0 %v630
      %v676 = vpop.f32.mrf.mxu0
      %v677 = vadd.f32 0.0, %v676
      %v678 = vpop.f32.mrf.mxu0
      %679 = vdwg.mxu0
      %v680 = vadd.f32 %v608, %v651
      %v681 = vadd.f32 %v609, %v664
      %v682 = vadd.f32 %v610, %v677
      %s683 = scalar_lea.vmem %s1, 28
      %v684 = vld [vmem:[%s683] sm:$0xf]
      %685 = vst [vmem:[#allocation1] ss:$4 sm:$0xff] %v197
      %v686 = vld.sshfl [vmem:[#allocation1] sm:$0xff pattern:$0x73625140]
      %v688 = vld.sshfl [vmem:[#allocation1 + $0x8] sm:$0xff pattern:$0x73625140]
      %v690 = vld.sshfl [vmem:[#allocation1 + $0x10] sm:$0xff pattern:$0x73625140]
      %692 = vrot.lane.b32.xlu0 %v686, 91
      %v693 = vpop.permute.xlu0 %692
      %694 = vrot.lane.b32.xlu0 %v688, 91
      %v695 = vpop.permute.xlu0 %694
      %696 = vrot.lane.b32.xlu0 %v690, 91
      %v697 = vpop.permute.xlu0 %696
      %vm698 = vcmask 744448
      %v699 = vsel %vm698, %v693, %v695
      %v700 = vsel %vm698, %v695, %v697
      %v702 = vsel %vm218, %v684, 0
      %v705 = vsel %vm222, %v699, 0
      %v708 = vsel %vm222, %v700, 0
      %v711 = vsel %vm222, %v697, 0
      %713 = vmatpush.bf16.msra.mxu0 0
      %714 = vmatpush.bf16.msra.mxu0 0
      %715 = vmatpush.bf16.msra.mxu0 0
      %716 = vmatpush.bf16.msra.mxu0 0
      %717 = vmatpush.bf16.msra.mxu0 0
      %718 = vmatpush.bf16.msra.mxu0 0
      %719 = vmatpush.bf16.msra.mxu0 0
      %720 = vmatpush.bf16.msra.mxu0 %v705
      %721 = vmatmul.bf16.gmra.mxu0 %v702
      %v722 = vpop.f32.mrf.mxu0
      %v723 = vadd.f32 0.0, %v722
      %v724 = vpop.f32.mrf.mxu0
      %725 = vdwg.mxu0
      %726 = vmatpush.bf16.msra.mxu0 0
      %727 = vmatpush.bf16.msra.mxu0 0
      %728 = vmatpush.bf16.msra.mxu0 0
      %729 = vmatpush.bf16.msra.mxu0 0
      %730 = vmatpush.bf16.msra.mxu0 0
      %731 = vmatpush.bf16.msra.mxu0 0
      %732 = vmatpush.bf16.msra.mxu0 0
      %733 = vmatpush.bf16.msra.mxu0 %v708
      %734 = vmatmul.bf16.gmra.mxu0 %v702
      %v735 = vpop.f32.mrf.mxu0
      %v736 = vadd.f32 0.0, %v735
      %v737 = vpop.f32.mrf.mxu0
      %738 = vdwg.mxu0
      %739 = vmatpush.bf16.msra.mxu0 0
      %740 = vmatpush.bf16.msra.mxu0 0
      %741 = vmatpush.bf16.msra.mxu0 0
      %742 = vmatpush.bf16.msra.mxu0 0
      %743 = vmatpush.bf16.msra.mxu0 0
      %744 = vmatpush.bf16.msra.mxu0 0
      %745 = vmatpush.bf16.msra.mxu0 0
      %746 = vmatpush.bf16.msra.mxu0 %v711
      %747 = vmatmul.bf16.gmra.mxu0 %v702
      %v748 = vpop.f32.mrf.mxu0
      %v749 = vadd.f32 0.0, %v748
      %v750 = vpop.f32.mrf.mxu0
      %751 = vdwg.mxu0
      %v752 = vadd.f32 %v680, %v723
      %v753 = vadd.f32 %v681, %v736
      %v754 = vadd.f32 %v682, %v749
      %s755 = scalar_lea.vmem %s1, 32
      %v756 = vld [vmem:[%s755] sm:$0xf]
      %757 = vst [vmem:[#allocation1] ss:$4 sm:$0xff] %v197
      %v758 = vld.sshfl [vmem:[#allocation1] sm:$0xff pattern:$0x73625140]
      %v760 = vld.sshfl [vmem:[#allocation1 + $0x8] sm:$0xff pattern:$0x73625140]
      %v762 = vld.sshfl [vmem:[#allocation1 + $0x10] sm:$0xff pattern:$0x73625140]
      %764 = vrot.lane.b32.xlu0 %v758, 90
      %v765 = vpop.permute.xlu0 %764
      %766 = vrot.lane.b32.xlu0 %v760, 90
      %v767 = vpop.permute.xlu0 %766
      %768 = vrot.lane.b32.xlu0 %v762, 90
      %v769 = vpop.permute.xlu0 %768
      %vm770 = vcmask 736256
      %v771 = vsel %vm770, %v765, %v767
      %v772 = vsel %vm770, %v767, %v769
      %v774 = vsel %vm218, %v756, 0
      %v777 = vsel %vm222, %v771, 0
      %v780 = vsel %vm222, %v772, 0
      %v783 = vsel %vm222, %v769, 0
      %785 = vmatpush.bf16.msra.mxu0 0
      %786 = vmatpush.bf16.msra.mxu0 0
      %787 = vmatpush.bf16.msra.mxu0 0
      %788 = vmatpush.bf16.msra.mxu0 0
      %789 = vmatpush.bf16.msra.mxu0 0
      %790 = vmatpush.bf16.msra.mxu0 0
      %791 = vmatpush.bf16.msra.mxu0 0
      %792 = vmatpush.bf16.msra.mxu0 %v777
      %793 = vmatmul.bf16.gmra.mxu0 %v774
      %v794 = vpop.f32.mrf.mxu0
      %v795 = vadd.f32 0.0, %v794
      %v796 = vpop.f32.mrf.mxu0
      %797 = vdwg.mxu0
      %798 = vmatpush.bf16.msra.mxu0 0
      %799 = vmatpush.bf16.msra.mxu0 0
      %800 = vmatpush.bf16.msra.mxu0 0
      %801 = vmatpush.bf16.msra.mxu0 0
      %802 = vmatpush.bf16.msra.mxu0 0
      %803 = vmatpush.bf16.msra.mxu0 0
      %804 = vmatpush.bf16.msra.mxu0 0
      %805 = vmatpush.bf16.msra.mxu0 %v780
      %806 = vmatmul.bf16.gmra.mxu0 %v774
      %v807 = vpop.f32.mrf.mxu0
      %v808 = vadd.f32 0.0, %v807
      %v809 = vpop.f32.mrf.mxu0
      %810 = vdwg.mxu0
      %811 = vmatpush.bf16.msra.mxu0 0
      %812 = vmatpush.bf16.msra.mxu0 0
      %813 = vmatpush.bf16.msra.mxu0 0
      %814 = vmatpush.bf16.msra.mxu0 0
      %815 = vmatpush.bf16.msra.mxu0 0
      %816 = vmatpush.bf16.msra.mxu0 0
      %817 = vmatpush.bf16.msra.mxu0 0
      %818 = vmatpush.bf16.msra.mxu0 %v783
      %819 = vmatmul.bf16.gmra.mxu0 %v774
      %v820 = vpop.f32.mrf.mxu0
      %v821 = vadd.f32 0.0, %v820
      %v822 = vpop.f32.mrf.mxu0
      %823 = vdwg.mxu0
      %v824 = vadd.f32 %v752, %v795
      %v825 = vadd.f32 %v753, %v808
      %v826 = vadd.f32 %v754, %v821
      %v827 = vld [vmem:[%s2] sm:$0xff]
      %829 = vset.pattern.permute.xlu0 0
      %830 = vperm.xlu0 %829, %v827
      %v831 = vpop.permute.xlu0 %830
      %v833 = vsub.f32 %v824, %v831
      %v834 = vsub.f32 %v825, %v831
      %v835 = vsub.f32 %v826, %v831
      %v836 = vld [vmem:[%s3] sm:$0x7]
      %v838 = vperm.slane %v836, 0
      %v839 = vperm.slane %v836, 1
      %v840 = vperm.slane %v836, 2
      %v844 = vmul.f32 %v833, %v838
      %v845 = vmul.f32 %v834, %v839
      %v846 = vmul.f32 %v835, %v840
      %v847 = vadd.f32 %v844, %v845
      %vm848 = vcmask 244736
      %v849 = vsel %vm848, %v846, 0.0
      %v850 = vadd.f32 %v847, %v849
      %851 = vadd.xlane.f32.xlu0 %v850
      %v852 = vpop.xlane.xlu0 %851
      %vm853 = vcmask 7168
      %854 = vst.msk [vmem:[%s195] sm:$0xff] %vm853, %v852
      %v855 = vmul.f32 %v844, %v844
      %v856 = vmul.f32 %v845, %v845
      %v857 = vmul.f32 %v846, %v846
      %v858 = vadd.f32 %v855, %v856
      %v859 = vsel %vm848, %v857, 0.0
      %v860 = vadd.f32 %v858, %v859
      %861 = vadd.xlane.f32.xlu0 %v860
      %v862 = vpop.xlane.xlu0 %861
      %vm863 = vcmask 15368
      %864 = vst.msk [vmem:[%s195] sm:$0xff] %vm863, %v862
      %p865 = scmp.lt.s32.totalorder %s15, 1
      %s866 = scalar_select %p865, %s15, 1
      %s867 = smul.addr %s866, 8
      %s868 = scalar_lea.vmem %s4, %s867
      // Predicated region
      $region37: #{conv_forward.2} parent=35 // pred_check
        %p869 = pneg %p122
      $region38: #{conv_forward.2} parent=35 // pred_check_branch
        %871 = sbr.rel (%p869) target = $region40
      $region39: #{conv_forward.2} parent=35 // pred_region
        _
      $region40: #{conv_forward.2} parent=35 // pred_fallthru
        _
    $region36: #{conv_forward.2} parent=5 // pred_fallthru
      _
    %p872 = scmp.le.s32.totalorder 2, %s10
    // Predicated region
    $region41: #{conv_forward.2} parent=5 // pred_check
      %p873 = pneg %p872
    $region42: #{conv_forward.2} parent=5 // pred_check_branch
      %875 = sbr.rel (%p873) target = $region44
    $region43: #{conv_forward.2} parent=5 // pred_region
      %s876 = ssub.s32 %s10, 2
      // Predicated region
      $region45: #{conv_forward.2} parent=43 // pred_check
        %p877 = pneg %p128
      $region46: #{conv_forward.2} parent=43 // pred_check_branch
        %879 = sbr.rel (%p877) target = $region48
      $region47: #{conv_forward.2} parent=43 // pred_region
        %p880 = scmp.lt.s32.totalorder %s16, 1
        %s881 = scalar_select %p880, %s16, 1
        %s882 = smul.addr %s881, 8
        %s883 = scalar_lea.vmem %s4, %s882
      $region48: #{conv_forward.2} parent=43 // pred_fallthru
        _
    $region44: #{conv_forward.2} parent=5 // pred_fallthru
      _
  $region6: #{conv_forward.2} parent=0 // loop_footer
    %s14 = sadd.s32 1, %s10
  $region7: #{conv_forward.2} parent=0 // loop_footer_branch
    %9 = sbr.rel target = $region3
  $region8: #{conv_forward.2} parent=0 // loop_exit
    _

</llo_original>
